<compile_context>
chip_gen: v5e
topology: v5e:2x2
jax: 0.10.0
libtpu: 0.0.40
codegen_flags: <defaults>
</compile_context>

<pallas_src>
import jax
import jax.numpy as jnp
from jax.experimental import pallas as pl
from jax.experimental.pallas import tpu as pltpu

# ---- problem sizes (char-VAE style) ----
S = 8            # sequence length
V = 16           # vocab size (one-hot width, softmax segment)
C = 4            # condition dim
H = 32           # hidden dim
L = 8            # latent dim
D_IN = S * V     # 128 : flattened sequence width (one MXU K pass)
TB = 128         # batch tile (f32 sublane-aligned; fills v5e MXU rows)
CB_W = 8         # [cond(4) | 1 | 0 pad]  -> ones lane folds dec_b1
ZC_W = L + CB_W  # 16 : fused decoder-first-layer input width
OUT_W = 2 * D_IN # 256 packed output: [mu|logvar|z|pad(104) | softmax(128)]

# row offsets inside the packed "narrow" (rows, 32) weight slab
R_ENC_W1 = 0
R_DEC_WT = R_ENC_W1 + D_IN        # 128
R_HEAD = R_DEC_WT + D_IN          # 256
R_ZCB = R_HEAD + H                # 288
NARROW_ROWS = R_ZCB + ZC_W        # 304

# row offsets inside the packed "wide" (rows, 128) weight slab
R_SEG = 0
R_DEC_W2 = R_SEG + D_IN           # 128
WIDE_ROWS = R_DEC_W2 + H          # 160


# ----------------------------- fused kernel --------------------------------
def _vae_fused_kernel(inv_temp_ref,                     # SMEM (1,)  = 1/T
                      x_ref, tgt_ref, condb_ref, eps_ref,
                      w_narrow_ref, w_wide_ref, bias_ref,
                      out_ref):
    # ---------------- encoder: h = relu(x @ W1 + b1) ----------------
    x = x_ref[...]                                               # (TB, 128)
    h = jnp.dot(x, w_narrow_ref[R_ENC_W1:R_ENC_W1 + D_IN, :],
                preferred_element_type=jnp.float32) + bias_ref[1:2, :H]
    h = jnp.maximum(h, 0.0)

    # merged mu/logvar head: one (H, 2L) matmul
    head = jnp.dot(h, w_narrow_ref[R_HEAD:R_HEAD + H, :2 * L],
                   preferred_element_type=jnp.float32) + bias_ref[2:3, :2 * L]
    mu = head[:, :L]
    logvar = head[:, L:2 * L]

    # reparameterization: z = mu + exp(0.5*logvar) * eps
    z = mu + jnp.exp(0.5 * logvar) * eps_ref[...]                # (TB, 8)

    # packed encoder outputs: sub-range stores (no lane concatenate)
    out_ref[:, 0:2 * L] = head                                   # [mu | logvar]
    out_ref[:, 2 * L:3 * L] = z
    out_ref[:, 3 * L:D_IN] = jnp.zeros((TB, D_IN - 3 * L), jnp.float32)

    # ---------------- decoder ----------------
    # fused first layer: [z | cond | 1 | 0] @ [Wz; Wc; b1; 0]  (+ tgt @ Wt)
    zc = jnp.concatenate([z, condb_ref[...]], axis=-1)           # (TB, 16)
    hd = (jnp.dot(tgt_ref[...], w_narrow_ref[R_DEC_WT:R_DEC_WT + D_IN, :],
                  preferred_element_type=jnp.float32)
          + jnp.dot(zc, w_narrow_ref[R_ZCB:R_ZCB + ZC_W, :],
                    preferred_element_type=jnp.float32))
    hd = jnp.maximum(hd, 0.0)

    logits = (jnp.dot(hd, w_wide_ref[R_DEC_W2:R_DEC_W2 + H, :],
                      preferred_element_type=jnp.float32)
              + bias_ref[0:1, :]) * inv_temp_ref[0]              # temp as a multiply

    # ---- exact per-time-step (16-lane segment) softmax, full-vreg ----
    # per-segment max via log-depth within-segment cyclic rotate + max
    # (rolls/compares are cheap: XLU/VPU have plenty of slack here).
    lane = jax.lax.broadcasted_iota(jnp.int32, (TB, D_IN), 1) % V
    m = logits
    for k in (1, 2, 4, 8):
        rot = jnp.where(lane >= k,
                        jnp.roll(m, k, axis=-1),        # source in same segment
                        jnp.roll(m, k - V, axis=-1))    # wrap within the segment
        m = jnp.maximum(m, rot)                         # after 4 rounds: seg max

    e = jnp.exp(logits - m)                             # max per segment == 1 -> no 0/0
    seg_sum = jnp.dot(e, w_wide_ref[R_SEG:R_SEG + D_IN, :],  # block-diag ones, MXU
                      preferred_element_type=jnp.float32)
    out_ref[:, D_IN:OUT_W] = e * pl.reciprocal(seg_sum, approx=False)


# --------------------------- pallas wrapper ---------------------------------
def _batch_spec(width):
    return pl.BlockSpec((TB, width), lambda i: (i, 0))


def _const_spec(shape):
    # same block every grid step -> fetched once, stays VMEM-resident
    return pl.BlockSpec(shape, lambda i: (0, 0))


@jax.jit
def vae_forward(inputs, targets, condition, eps, packed, temperature=1.0):
    """inputs/targets: (B, S, V) one-hot, condition: (B, C), eps: (B, L)."""
    bn = inputs.shape[0]
    x = inputs.reshape(bn, D_IN).astype(jnp.float32)
    t = targets.reshape(bn, D_IN).astype(jnp.float32)
    # layout plumbing: [cond | 1 | 0] so dec_b1 folds into the fused matmul
    condb = jnp.concatenate(
        [condition.astype(jnp.float32),
         jnp.ones((bn, 1), jnp.float32),
         jnp.zeros((bn, CB_W - C - 1), jnp.float32)], axis=-1)
    eps = eps.astype(jnp.float32)
    inv_temp = jnp.full((1,), 1.0 / temperature, jnp.float32)

    pad = (-bn) % TB                                   # pad batch to a tile multiple
    if pad:
        x = jnp.pad(x, ((0, pad), (0, 0)))
        t = jnp.pad(t, ((0, pad), (0, 0)))
        condb = jnp.pad(condb, ((0, pad), (0, 0)))
        eps = jnp.pad(eps, ((0, pad), (0, 0)))
    bp = bn + pad

    out = pl.pallas_call(
        _vae_fused_kernel,
        out_shape=jax.ShapeDtypeStruct((bp, OUT_W), jnp.float32),
        grid=(bp // TB,),
        in_specs=[
            pl.BlockSpec(memory_space=pltpu.MemorySpace.SMEM),   # 1/T scalar
            _batch_spec(D_IN),                                   # x
            _batch_spec(D_IN),                                   # targets
            _batch_spec(CB_W),                                   # [cond|1|0]
            _batch_spec(L),                                      # eps
            _const_spec((NARROW_ROWS, H)),                       # packed narrow weights
            _const_spec((WIDE_ROWS, D_IN)),                      # seg matrix + dec_w2
            _const_spec((8, D_IN)),                              # packed bias rows
        ],
        out_specs=pl.BlockSpec((TB, OUT_W), lambda i: (i, 0)),
        compiler_params=pltpu.CompilerParams(
            dimension_semantics=("parallel",)),                  # both TCs on v7x
    )(inv_temp, x, t, condb, eps,
      packed["w_narrow"], packed["w_wide"], packed["biases"])

    mu = out[:bn, :L]
    logvar = out[:bn, L:2 * L]
    z = out[:bn, 2 * L:3 * L]
    decoded = out[:bn, D_IN:OUT_W].reshape(bn, S, V)
    return mu, logvar, z, decoded


# --------------------------- parameter packing ------------------------------
def pack_params(p):
    """Pack the 10 logical parameter tensors into 3 slabs (done once at init)."""
    w_narrow = jnp.zeros((NARROW_ROWS, H), jnp.float32)
    w_narrow = w_narrow.at[R_ENC_W1:R_ENC_W1 + D_IN, :].set(p["enc_w1"])
    w_narrow = w_narrow.at[R_DEC_WT:R_DEC_WT + D_IN, :].set(p["dec_wt"])
    w_narrow = w_narrow.at[R_HEAD:R_HEAD + H, :2 * L].set(p["enc_whead"])
    w_narrow = w_narrow.at[R_ZCB:R_ZCB + L, :].set(p["dec_wz"])
    w_narrow = w_narrow.at[R_ZCB + L:R_ZCB + L + C, :].set(p["dec_wc"])
    w_narrow = w_narrow.at[R_ZCB + L + C, :].set(p["dec_b1"].reshape(H))

    seg = jnp.kron(jnp.eye(S, dtype=jnp.float32), jnp.ones((V, V), jnp.float32))
    w_wide = jnp.zeros((WIDE_ROWS, D_IN), jnp.float32)
    w_wide = w_wide.at[R_SEG:R_SEG + D_IN, :].set(seg)
    w_wide = w_wide.at[R_DEC_W2:R_DEC_W2 + H, :].set(p["dec_w2"])

    biases = jnp.zeros((8, D_IN), jnp.float32)
    biases = biases.at[0, :].set(p["dec_b2"].reshape(D_IN))
    biases = biases.at[1, :H].set(p["enc_b1"].reshape(H))
    biases = biases.at[2, :2 * L].set(p["enc_bhead"].reshape(2 * L))

    return {"w_narrow": w_narrow, "w_wide": w_wide, "biases": biases}


def init_params(key):
    ks = jax.random.split(key, 6)
    scale = 0.05
    return {
        "enc_w1":    scale * jax.random.normal(ks[0], (D_IN, H), jnp.float32),
        "enc_b1":    jnp.zeros((1, H), jnp.float32),
        "enc_whead": scale * jax.random.normal(ks[1], (H, 2 * L), jnp.float32),
        "enc_bhead": jnp.zeros((1, 2 * L), jnp.float32),
        "dec_wz":    scale * jax.random.normal(ks[2], (L, H), jnp.float32),
        "dec_wc":    scale * jax.random.normal(ks[3], (C, H), jnp.float32),
        "dec_wt":    scale * jax.random.normal(ks[4], (D_IN, H), jnp.float32),
        "dec_b1":    jnp.zeros((1, H), jnp.float32),
        "dec_w2":    scale * jax.random.normal(ks[5], (H, D_IN), jnp.float32),
        "dec_b2":    jnp.zeros((1, D_IN), jnp.float32),
    }


# ------------------------------- VAE ----------------------------------------
class VAE:
    """JAX/Pallas port of the Blockade VAE. Registered buffers are plain Python
    scalars (they never participate in the forward compute)."""

    def __init__(self, params, n_steps=None):
        self.params = params
        self.packed = pack_params(params)     # one-time DMA-friendly packing
        self.steps_seen = 0
        self.kld_max = 0.0
        self.kld_weight = 0.0
        if n_steps is not None:
            self.kld_inc = (self.kld_max - self.kld_weight) / max(1, n_steps // 2)
        else:
            self.kld_inc = 0.0

    def forward(self, inputs, targets, condition, eps, temperature=1.0):
        # the PyTorch `device` argument is meaningless in JAX and is dropped.
        return vae_forward(inputs, targets, condition, eps, self.packed, temperature)


# --------------------------- pure-JAX reference ------------------------------
def _ref_forward(inputs, targets, condition, eps, params, temperature=1.0):
    bn = inputs.shape[0]
    x = inputs.reshape(bn, D_IN)
    t = targets.reshape(bn, D_IN)
    hp = jax.lax.Precision.HIGHEST
    h = jax.nn.relu(jnp.dot(x, params["enc_w1"], precision=hp) + params["enc_b1"])
    head = jnp.dot(h, params["enc_whead"], precision=hp) + params["enc_bhead"]
    mu, logvar = head[:, :L], head[:, L:]
    z = mu + jnp.exp(0.5 * logvar) * eps
    hd = jax.nn.relu(jnp.dot(z, params["dec_wz"], precision=hp)
                     + jnp.dot(condition, params["dec_wc"], precision=hp)
                     + jnp.dot(t, params["dec_wt"], precision=hp)
                     + params["dec_b1"])
    logits = (jnp.dot(hd, params["dec_w2"], precision=hp) + params["dec_b2"]) / temperature
    decoded = jax.nn.softmax(logits.reshape(bn, S, V), axis=-1)
    return mu, logvar, z, decoded


if __name__ == "__main__":
    key = jax.random.PRNGKey(0)
    k_par, k_in, k_tg, k_cond, k_eps = jax.random.split(key, 5)

    params = init_params(k_par)
    vae = VAE(params, n_steps=100)

    # batched forward: grid=(2,) tiles of 128 rows, parallel batch axis
    BATCH = 256
    in_tok = jax.random.randint(k_in, (BATCH, S), 0, V)
    tg_tok = jax.random.randint(k_tg, (BATCH, S), 0, V)
    inputs = jax.nn.one_hot(in_tok, V, dtype=jnp.float32)        # (B, S, V)
    targets = jax.nn.one_hot(tg_tok, V, dtype=jnp.float32)       # (B, S, V)
    condition = jax.random.normal(k_cond, (BATCH, C), jnp.float32)
    eps = jax.random.normal(k_eps, (BATCH, L), jnp.float32)

    temp = 0.8
    mu, logvar, z, decoded = vae.forward(inputs, targets, condition, eps, temperature=temp)
    jax.block_until_ready((mu, logvar, z, decoded))

    # shape checks
    assert mu.shape == (BATCH, L) and logvar.shape == (BATCH, L) and z.shape == (BATCH, L)
    assert decoded.shape == (BATCH, S, V)
    # exact per-segment softmax + exact reciprocal -> rows sum to 1 tightly
    assert bool(jnp.allclose(jnp.sum(decoded, axis=-1), 1.0, atol=1e-4))

    # numeric check against a pure-JAX reference
    rmu, rlv, rz, rdec = _ref_forward(inputs, targets, condition, eps, params, temp)
    assert bool(jnp.allclose(mu, rmu, atol=1e-3))
    assert bool(jnp.allclose(logvar, rlv, atol=1e-3))
    assert bool(jnp.allclose(z, rz, atol=1e-3))
    assert bool(jnp.allclose(decoded, rdec, atol=1e-3))

    # a small, non-tile-multiple batch also works (padded internally, padding sliced off)
    m2, lv2, z2, d2 = vae.forward(inputs[:2], targets[:2], condition[:2], eps[:2],
                                  temperature=1.0)
    jax.block_until_ready(d2)
    assert d2.shape == (2, S, V)
    rm2, _, _, rd2 = _ref_forward(inputs[:2], targets[:2], condition[:2], eps[:2], params, 1.0)
    assert bool(jnp.allclose(m2, rm2, atol=1e-3))
    assert bool(jnp.allclose(d2, rd2, atol=1e-3))

    print("KERNEL_OK")
</pallas_src>

<mosaic_0001>
module attributes {stable_mosaic.version = 11 : i64} {
  func.func @_vae_fused_kernel(%arg0: i32, %arg1: memref<1xf32, #tpu.memory_space<smem>>, %arg2: memref<128x128xf32, #tpu.memory_space<vmem>>, %arg3: memref<128x128xf32, #tpu.memory_space<vmem>>, %arg4: memref<128x8xf32, #tpu.memory_space<vmem>>, %arg5: memref<128x8xf32, #tpu.memory_space<vmem>>, %arg6: memref<304x32xf32, #tpu.memory_space<vmem>>, %arg7: memref<160x128xf32, #tpu.memory_space<vmem>>, %arg8: memref<8x128xf32, #tpu.memory_space<vmem>>, %arg9: memref<128x256xf32, #tpu.memory_space<vmem>>) attributes {dimension_semantics = [#tpu.dimension_semantics<parallel>], iteration_bounds = array<i64: 2>, scalar_prefetch = 0 : i64, scratch_operands = 0 : i64, tpu.core_type = #tpu.core_type<tc>, window_params = [{transform_indices = @transform_0, window_bounds = array<i64: 1>}, {transform_indices = @transform_1, window_bounds = array<i64: 128, 128>}, {transform_indices = @transform_2, window_bounds = array<i64: 128, 128>}, {transform_indices = @transform_3, window_bounds = array<i64: 128, 8>}, {transform_indices = @transform_4, window_bounds = array<i64: 128, 8>}, {pipeline_mode = #tpu.pipeline_mode<synchronous>, transform_indices = @transform_5, window_bounds = array<i64: 304, 32>}, {pipeline_mode = #tpu.pipeline_mode<synchronous>, transform_indices = @transform_6, window_bounds = array<i64: 160, 128>}, {pipeline_mode = #tpu.pipeline_mode<synchronous>, transform_indices = @transform_7, window_bounds = array<i64: 8, 128>}, {transform_indices = @transform_8, window_bounds = array<i64: 128, 256>}]} {
    %c0 = arith.constant 0 : index
    %c0_0 = arith.constant 0 : index
    %0 = vector.load %arg2[%c0, %c0_0] : memref<128x128xf32, #tpu.memory_space<vmem>>, vector<128x128xf32>
    %c0_1 = arith.constant 0 : index
    %c0_2 = arith.constant 0 : index
    %1 = vector.load %arg6[%c0_1, %c0_2] : memref<304x32xf32, #tpu.memory_space<vmem>>, vector<128x32xf32>
    %cst = arith.constant dense<0.000000e+00> : vector<128x32xf32>
    %2 = tpu.matmul %0, %1, %cst {dimension_numbers = #tpu.dot_dimension_numbers<[1], [0], [0], [1], [0, 0, 1, 1], [], []>} : vector<128x128xf32>, vector<128x32xf32>, vector<128x32xf32> -> vector<128x32xf32>
    %c1 = arith.constant 1 : index
    %c0_3 = arith.constant 0 : index
    %3 = vector.load %arg8[%c1, %c0_3] : memref<8x128xf32, #tpu.memory_space<vmem>>, vector<1x32xf32>
    %4 = vector.broadcast %3 : vector<1x32xf32> to vector<128x32xf32>
    %5 = arith.addf %2, %4 : vector<128x32xf32>
    %cst_4 = arith.constant 0.000000e+00 : f32
    %6 = vector.broadcast %cst_4 : f32 to vector<128x32xf32>
    %7 = arith.maximumf %5, %6 : vector<128x32xf32>
    %c256 = arith.constant 256 : index
    %c0_5 = arith.constant 0 : index
    %8 = vector.load %arg6[%c256, %c0_5] : memref<304x32xf32, #tpu.memory_space<vmem>>, vector<32x16xf32>
    %cst_6 = arith.constant dense<0.000000e+00> : vector<128x16xf32>
    %9 = tpu.matmul %7, %8, %cst_6 {dimension_numbers = #tpu.dot_dimension_numbers<[1], [0], [0], [1], [0, 0, 1, 1], [], []>} : vector<128x32xf32>, vector<32x16xf32>, vector<128x16xf32> -> vector<128x16xf32>
    %c2 = arith.constant 2 : index
    %c0_7 = arith.constant 0 : index
    %10 = vector.load %arg8[%c2, %c0_7] : memref<8x128xf32, #tpu.memory_space<vmem>>, vector<1x16xf32>
    %11 = vector.broadcast %10 : vector<1x16xf32> to vector<128x16xf32>
    %12 = arith.addf %9, %11 : vector<128x16xf32>
    %13 = vector.extract_strided_slice %12 {offsets = [0, 0], sizes = [128, 8], strides = [1, 1]} : vector<128x16xf32> to vector<128x8xf32>
    %14 = vector.extract_strided_slice %12 {offsets = [0, 8], sizes = [128, 8], strides = [1, 1]} : vector<128x16xf32> to vector<128x8xf32>
    %cst_8 = arith.constant 5.000000e-01 : f32
    %15 = vector.broadcast %cst_8 : f32 to vector<128x8xf32>
    %16 = arith.mulf %15, %14 : vector<128x8xf32>
    %17 = math.exp %16 : vector<128x8xf32>
    %c0_9 = arith.constant 0 : index
    %c0_10 = arith.constant 0 : index
    %18 = vector.load %arg5[%c0_9, %c0_10] : memref<128x8xf32, #tpu.memory_space<vmem>>, vector<128x8xf32>
    %19 = arith.mulf %17, %18 : vector<128x8xf32>
    %20 = arith.addf %13, %19 : vector<128x8xf32>
    %c0_11 = arith.constant 0 : index
    %c0_12 = arith.constant 0 : index
    %21 = vector.load %arg9[%c0_11, %c0_12] : memref<128x256xf32, #tpu.memory_space<vmem>>, vector<128x16xf32>
    tpu.vector_store %arg9[%c0_11, %c0_12], %12 {strides = array<i32>} : memref<128x256xf32, #tpu.memory_space<vmem>>, vector<128x16xf32>,
    %c0_13 = arith.constant 0 : index
    %c16 = arith.constant 16 : index
    %22 = vector.load %arg9[%c0_13, %c16] : memref<128x256xf32, #tpu.memory_space<vmem>>, vector<128x8xf32>
    tpu.vector_store %arg9[%c0_13, %c16], %20 {strides = array<i32>} : memref<128x256xf32, #tpu.memory_space<vmem>>, vector<128x8xf32>,
    %cst_14 = arith.constant 0.000000e+00 : f32
    %23 = vector.broadcast %cst_14 : f32 to vector<128x104xf32>
    %c0_15 = arith.constant 0 : index
    %c24 = arith.constant 24 : index
    %24 = vector.load %arg9[%c0_15, %c24] : memref<128x256xf32, #tpu.memory_space<vmem>>, vector<128x104xf32>
    tpu.vector_store %arg9[%c0_15, %c24], %23 {strides = array<i32>} : memref<128x256xf32, #tpu.memory_space<vmem>>, vector<128x104xf32>,
    %c0_16 = arith.constant 0 : index
    %c0_17 = arith.constant 0 : index
    %25 = vector.load %arg4[%c0_16, %c0_17] : memref<128x8xf32, #tpu.memory_space<vmem>>, vector<128x8xf32>
    %26 = tpu.concatenate %20, %25 in 1 : vector<128x8xf32>, vector<128x8xf32> -> vector<128x16xf32>
    %c0_18 = arith.constant 0 : index
    %c0_19 = arith.constant 0 : index
    %27 = vector.load %arg3[%c0_18, %c0_19] : memref<128x128xf32, #tpu.memory_space<vmem>>, vector<128x128xf32>
    %c128 = arith.constant 128 : index
    %c0_20 = arith.constant 0 : index
    %28 = vector.load %arg6[%c128, %c0_20] : memref<304x32xf32, #tpu.memory_space<vmem>>, vector<128x32xf32>
    %cst_21 = arith.constant dense<0.000000e+00> : vector<128x32xf32>
    %29 = tpu.matmul %27, %28, %cst_21 {dimension_numbers = #tpu.dot_dimension_numbers<[1], [0], [0], [1], [0, 0, 1, 1], [], []>} : vector<128x128xf32>, vector<128x32xf32>, vector<128x32xf32> -> vector<128x32xf32>
    %c288 = arith.constant 288 : index
    %c0_22 = arith.constant 0 : index
    %30 = vector.load %arg6[%c288, %c0_22] : memref<304x32xf32, #tpu.memory_space<vmem>>, vector<16x32xf32>
    %cst_23 = arith.constant dense<0.000000e+00> : vector<128x32xf32>
    %31 = tpu.matmul %26, %30, %cst_23 {dimension_numbers = #tpu.dot_dimension_numbers<[1], [0], [0], [1], [0, 0, 1, 1], [], []>} : vector<128x16xf32>, vector<16x32xf32>, vector<128x32xf32> -> vector<128x32xf32>
    %32 = arith.addf %29, %31 : vector<128x32xf32>
    %cst_24 = arith.constant 0.000000e+00 : f32
    %33 = vector.broadcast %cst_24 : f32 to vector<128x32xf32>
    %34 = arith.maximumf %32, %33 : vector<128x32xf32>
    %c128_25 = arith.constant 128 : index
    %c0_26 = arith.constant 0 : index
    %35 = vector.load %arg7[%c128_25, %c0_26] : memref<160x128xf32, #tpu.memory_space<vmem>>, vector<32x128xf32>
    %cst_27 = arith.constant dense<0.000000e+00> : vector<128x128xf32>
    %36 = tpu.matmul %34, %35, %cst_27 {dimension_numbers = #tpu.dot_dimension_numbers<[1], [0], [0], [1], [0, 0, 1, 1], [], []>} : vector<128x32xf32>, vector<32x128xf32>, vector<128x128xf32> -> vector<128x128xf32>
    %c0_28 = arith.constant 0 : index
    %c0_29 = arith.constant 0 : index
    %37 = vector.load %arg8[%c0_28, %c0_29] : memref<8x128xf32, #tpu.memory_space<vmem>>, vector<1x128xf32>
    %38 = vector.broadcast %37 : vector<1x128xf32> to vector<128x128xf32>
    %39 = arith.addf %36, %38 : vector<128x128xf32>
    %c0_30 = arith.constant 0 : index
    %40 = memref.load %arg1[%c0_30] : memref<1xf32, #tpu.memory_space<smem>>
    %41 = vector.broadcast %40 : f32 to vector<128x128xf32>
    %42 = arith.mulf %39, %41 : vector<128x128xf32>
    %43 = tpu.iota {dimensions = array<i32: 1>} : vector<128x128xi32>
    %c16_i32 = arith.constant 16 : i32
    %c0_i32 = arith.constant 0 : i32
    %44 = arith.cmpi eq, %c16_i32, %c0_i32 : i32
    %c1_i32 = arith.constant 1 : i32
    %45 = arith.select %44, %c1_i32, %c16_i32 : i32
    %46 = vector.broadcast %45 : i32 to vector<128x128xi32>
    %47 = arith.remsi %43, %46 : vector<128x128xi32>
    %c0_i32_31 = arith.constant 0 : i32
    %48 = vector.broadcast %c0_i32_31 : i32 to vector<128x128xi32>
    %49 = arith.cmpi ne, %47, %48 : vector<128x128xi32>
    %c0_i32_32 = arith.constant 0 : i32
    %50 = vector.broadcast %c0_i32_32 : i32 to vector<128x128xi32>
    %51 = arith.cmpi slt, %47, %50 : vector<128x128xi32>
    %c0_i32_33 = arith.constant 0 : i32
    %52 = arith.cmpi slt, %45, %c0_i32_33 : i32
    %53 = vector.broadcast %52 : i1 to vector<128x128xi1>
    %54 = vector.broadcast %53 : vector<128x128xi1> to vector<128x128xi1>
    %55 = arith.xori %51, %54 : vector<128x128xi1>
    %56 = arith.andi %55, %49 : vector<128x128xi1>
    %57 = vector.broadcast %45 : i32 to vector<128x128xi32>
    %58 = arith.addi %47, %57 : vector<128x128xi32>
    %59 = arith.select %56, %58, %47 : vector<128x128xi1>, vector<128x128xi32>
    %c1_i32_34 = arith.constant 1 : i32
    %60 = vector.broadcast %c1_i32_34 : i32 to vector<128x128xi32>
    %61 = arith.cmpi sge, %59, %60 : vector<128x128xi32>
    %62 = vector.extract_strided_slice %42 {offsets = [0, 127], sizes = [128, 1], strides = [1, 1]} : vector<128x128xf32> to vector<128x1xf32>
    %63 = vector.extract_strided_slice %42 {offsets = [0, 0], sizes = [128, 127], strides = [1, 1]} : vector<128x128xf32> to vector<128x127xf32>
    %64 = tpu.concatenate %62, %63 in 1 : vector<128x1xf32>, vector<128x127xf32> -> vector<128x128xf32>
    %65 = vector.extract_strided_slice %42 {offsets = [0, 15], sizes = [128, 113], strides = [1, 1]} : vector<128x128xf32> to vector<128x113xf32>
    %66 = vector.extract_strided_slice %42 {offsets = [0, 0], sizes = [128, 15], strides = [1, 1]} : vector<128x128xf32> to vector<128x15xf32>
    %67 = tpu.concatenate %65, %66 in 1 : vector<128x113xf32>, vector<128x15xf32> -> vector<128x128xf32>
    %68 = arith.select %61, %64, %67 : vector<128x128xi1>, vector<128x128xf32>
    %69 = arith.maximumf %42, %68 : vector<128x128xf32>
    %c2_i32 = arith.constant 2 : i32
    %70 = vector.broadcast %c2_i32 : i32 to vector<128x128xi32>
    %71 = arith.cmpi sge, %59, %70 : vector<128x128xi32>
    %72 = vector.extract_strided_slice %69 {offsets = [0, 126], sizes = [128, 2], strides = [1, 1]} : vector<128x128xf32> to vector<128x2xf32>
    %73 = vector.extract_strided_slice %69 {offsets = [0, 0], sizes = [128, 126], strides = [1, 1]} : vector<128x128xf32> to vector<128x126xf32>
    %74 = tpu.concatenate %72, %73 in 1 : vector<128x2xf32>, vector<128x126xf32> -> vector<128x128xf32>
    %75 = vector.extract_strided_slice %69 {offsets = [0, 14], sizes = [128, 114], strides = [1, 1]} : vector<128x128xf32> to vector<128x114xf32>
    %76 = vector.extract_strided_slice %69 {offsets = [0, 0], sizes = [128, 14], strides = [1, 1]} : vector<128x128xf32> to vector<128x14xf32>
    %77 = tpu.concatenate %75, %76 in 1 : vector<128x114xf32>, vector<128x14xf32> -> vector<128x128xf32>
    %78 = arith.select %71, %74, %77 : vector<128x128xi1>, vector<128x128xf32>
    %79 = arith.maximumf %69, %78 : vector<128x128xf32>
    %c4_i32 = arith.constant 4 : i32
    %80 = vector.broadcast %c4_i32 : i32 to vector<128x128xi32>
    %81 = arith.cmpi sge, %59, %80 : vector<128x128xi32>
    %82 = vector.extract_strided_slice %79 {offsets = [0, 124], sizes = [128, 4], strides = [1, 1]} : vector<128x128xf32> to vector<128x4xf32>
    %83 = vector.extract_strided_slice %79 {offsets = [0, 0], sizes = [128, 124], strides = [1, 1]} : vector<128x128xf32> to vector<128x124xf32>
    %84 = tpu.concatenate %82, %83 in 1 : vector<128x4xf32>, vector<128x124xf32> -> vector<128x128xf32>
    %85 = vector.extract_strided_slice %79 {offsets = [0, 12], sizes = [128, 116], strides = [1, 1]} : vector<128x128xf32> to vector<128x116xf32>
    %86 = vector.extract_strided_slice %79 {offsets = [0, 0], sizes = [128, 12], strides = [1, 1]} : vector<128x128xf32> to vector<128x12xf32>
    %87 = tpu.concatenate %85, %86 in 1 : vector<128x116xf32>, vector<128x12xf32> -> vector<128x128xf32>
    %88 = arith.select %81, %84, %87 : vector<128x128xi1>, vector<128x128xf32>
    %89 = arith.maximumf %79, %88 : vector<128x128xf32>
    %c8_i32 = arith.constant 8 : i32
    %90 = vector.broadcast %c8_i32 : i32 to vector<128x128xi32>
    %91 = arith.cmpi sge, %59, %90 : vector<128x128xi32>
    %92 = vector.extract_strided_slice %89 {offsets = [0, 120], sizes = [128, 8], strides = [1, 1]} : vector<128x128xf32> to vector<128x8xf32>
    %93 = vector.extract_strided_slice %89 {offsets = [0, 0], sizes = [128, 120], strides = [1, 1]} : vector<128x128xf32> to vector<128x120xf32>
    %94 = tpu.concatenate %92, %93 in 1 : vector<128x8xf32>, vector<128x120xf32> -> vector<128x128xf32>
    %95 = vector.extract_strided_slice %89 {offsets = [0, 8], sizes = [128, 120], strides = [1, 1]} : vector<128x128xf32> to vector<128x120xf32>
    %96 = vector.extract_strided_slice %89 {offsets = [0, 0], sizes = [128, 8], strides = [1, 1]} : vector<128x128xf32> to vector<128x8xf32>
    %97 = tpu.concatenate %95, %96 in 1 : vector<128x120xf32>, vector<128x8xf32> -> vector<128x128xf32>
    %98 = arith.select %91, %94, %97 : vector<128x128xi1>, vector<128x128xf32>
    %99 = arith.maximumf %89, %98 : vector<128x128xf32>
    %100 = arith.subf %42, %99 : vector<128x128xf32>
    %101 = math.exp %100 : vector<128x128xf32>
    %c0_35 = arith.constant 0 : index
    %c0_36 = arith.constant 0 : index
    %102 = vector.load %arg7[%c0_35, %c0_36] : memref<160x128xf32, #tpu.memory_space<vmem>>, vector<128x128xf32>
    %cst_37 = arith.constant dense<0.000000e+00> : vector<128x128xf32>
    %103 = tpu.matmul %101, %102, %cst_37 {dimension_numbers = #tpu.dot_dimension_numbers<[1], [0], [0], [1], [0, 0, 1, 1], [], []>} : vector<128x128xf32>, vector<128x128xf32>, vector<128x128xf32> -> vector<128x128xf32>
    %104 = tpu.reciprocal %103 : vector<128x128xf32> -> vector<128x128xf32>
    %105 = arith.mulf %101, %104 : vector<128x128xf32>
    %c0_38 = arith.constant 0 : index
    %c128_39 = arith.constant 128 : index
    %106 = vector.load %arg9[%c0_38, %c128_39] : memref<128x256xf32, #tpu.memory_space<vmem>>, vector<128x128xf32>
    tpu.vector_store %arg9[%c0_38, %c128_39], %105 {strides = array<i32>} : memref<128x256xf32, #tpu.memory_space<vmem>>, vector<128x128xf32>,
    return
  }
  func.func @transform_0(%arg0: i32) -> i32 {
    %c0_i32 = arith.constant 0 : i32
    %c0_i32_0 = arith.constant 0 : i32
    return %c0_i32 : i32
  }
  func.func @transform_1(%arg0: i32) -> (i32, i32) {
    %c0_i32 = arith.constant 0 : i32
    %c0_i32_0 = arith.constant 0 : i32
    return %arg0, %c0_i32 : i32, i32
  }
  func.func @transform_2(%arg0: i32) -> (i32, i32) {
    %c0_i32 = arith.constant 0 : i32
    %c0_i32_0 = arith.constant 0 : i32
    return %arg0, %c0_i32 : i32, i32
  }
  func.func @transform_3(%arg0: i32) -> (i32, i32) {
    %c0_i32 = arith.constant 0 : i32
    %c0_i32_0 = arith.constant 0 : i32
    return %arg0, %c0_i32 : i32, i32
  }
  func.func @transform_4(%arg0: i32) -> (i32, i32) {
    %c0_i32 = arith.constant 0 : i32
    %c0_i32_0 = arith.constant 0 : i32
    return %arg0, %c0_i32 : i32, i32
  }
  func.func @transform_5(%arg0: i32) -> (i32, i32) {
    %c0_i32 = arith.constant 0 : i32
    %c0_i32_0 = arith.constant 0 : i32
    %c0_i32_1 = arith.constant 0 : i32
    return %c0_i32, %c0_i32_0 : i32, i32
  }
  func.func @transform_6(%arg0: i32) -> (i32, i32) {
    %c0_i32 = arith.constant 0 : i32
    %c0_i32_0 = arith.constant 0 : i32
    %c0_i32_1 = arith.constant 0 : i32
    return %c0_i32, %c0_i32_0 : i32, i32
  }
  func.func @transform_7(%arg0: i32) -> (i32, i32) {
    %c0_i32 = arith.constant 0 : i32
    %c0_i32_0 = arith.constant 0 : i32
    %c0_i32_1 = arith.constant 0 : i32
    return %c0_i32, %c0_i32_0 : i32, i32
  }
  func.func @transform_8(%arg0: i32) -> (i32, i32) {
    %c0_i32 = arith.constant 0 : i32
    %c0_i32_0 = arith.constant 0 : i32
    return %arg0, %c0_i32 : i32, i32
  }
}

</mosaic_0001>

<llo_original>
// kernel: vae_forward.1
$region0: #{vae_forward.1}
  #allocation0 [shape = 'u32[]', space=smem, size = 0x4, offset = 0x4, fixed_abs, tag = 'smem constant byte address 0x4 - core index']
  #allocation1 [shape = 'u32[72,128]{1,0:T(1,128)}', space=vmem, size = 0x9000, scoped, tag = 'internal scratch']
  #allocation2 [shape = 'f32[1]{0:T(128)S(6)}', space=smem, size = 0x200, scoped, tag = 'scoped memory for vae_forward.1']
  %s0 = inlined_call_operand.<no memory space> [shape: f32[1], index: 0, kind: input, shape index: {}]
  %s1 = inlined_call_operand.vmem [shape: f32[256,128], index: 1, kind: input, shape index: {}]
  %s2 = inlined_call_operand.vmem [shape: f32[256,128], index: 2, kind: input, shape index: {}]
  %s3 = inlined_call_operand.vmem [shape: f32[256,8], index: 3, kind: input, shape index: {}]
  %s4 = inlined_call_operand.vmem [shape: f32[256,8], index: 4, kind: input, shape index: {}]
  %s5 = inlined_call_operand.vmem [shape: f32[304,32], index: 5, kind: input, shape index: {}]
  %s6 = inlined_call_operand.vmem [shape: f32[160,128], index: 6, kind: input, shape index: {}]
  %s7 = inlined_call_operand.vmem [shape: f32[8,128], index: 7, kind: input, shape index: {}]
  %s8 = inlined_call_operand.vmem [shape: f32[256,256], index: 8, kind: output, shape index: {}]
  %s9 = sld [smem:[#allocation0]]
  $region65: #{vae_forward.1} parent=0
    _
  %s11 = ssub.s32 1, %s9
  %s12 = scalar_select 0, %s11, %s9
  %13 = sst [smem:[#allocation2]] %s0
  loop: start=0, step=1, limit=4
  $region2: #{vae_forward.1} parent=0 // loop_pre_header
    _
  $region3: #{vae_forward.1} parent=0 // loop_header
    %s15 = sphi 0, %s19
    %p16 = scmp.ge.s32.totalorder %s15, 4
    %s23 = sphi 0, %s23
    %s25 = sphi 0, %s23
    %s26 = sphi 0, %s25
    %s40 = sphi 0, %s26
    %s46 = sphi 0, %s48
    %s49 = sphi 0, %s46
    %s50 = sphi 0, %s49
    %s66 = sphi 0, %s50
    %s72 = sphi 0, %s74
    %s75 = sphi 0, %s72
    %s76 = sphi 0, %s75
    %s92 = sphi 0, %s76
    %s98 = sphi 0, %s100
    %s101 = sphi 0, %s98
    %s102 = sphi 0, %s101
    %s118 = sphi 0, %s102
    %s124 = sphi 0, %s126
    %s127 = sphi 0, %s124
    %s128 = sphi 0, %s127
    %s144 = sphi 0, %s128
    %s148 = sphi 0, %s148
    %s150 = sphi 0, %s148
    %s151 = sphi 0, %s150
    %s165 = sphi 0, %s151
    %s169 = sphi 0, %s169
    %s171 = sphi 0, %s169
    %s172 = sphi 0, %s171
    %s186 = sphi 0, %s172
    %s190 = sphi 0, %s190
    %s192 = sphi 0, %s190
    %s193 = sphi 0, %s192
    %s207 = sphi 0, %s193
    %s213 = sphi 0, %s215
    %s216 = sphi 0, %s213
    %s217 = sphi 0, %s216
    %s233 = sphi 0, %s217
  $region4: #{vae_forward.1} parent=0 // loop_header_branch
    %18 = sbr.rel (%p16) target = $region8
  $region5: #{vae_forward.1} parent=0 // loop_body
    %s20 = ssub.s32 %s15, 1
    %s21 = ssub.s32 %s15, 2
    %s22 = sadd.s32 %s15, 1
    %s24 = sadd.s32 %s23, 1
    %p27 = scmp.eq.s32.totalorder %s15, 1
    %p28 = scmp.ne.s32.totalorder %s23, %s25
    %p29 = scmp.eq.s32.totalorder %s15, 0
    %p30 = por %p28, %p29
    %p31 = scmp.ne.s32.totalorder %s23, %s25
    %p32 = scmp.eq.s32.totalorder %s20, 1
    %p33 = por %p31, %p32
    %p34 = scmp.ne.s32.totalorder %s25, %s26
    %p35 = scmp.eq.s32.totalorder %s20, 0
    %p36 = por %p34, %p35
    %p37 = scmp.ne.s32.totalorder %s25, %s26
    %p38 = scmp.eq.s32.totalorder %s21, 1
    %p39 = por %p37, %p38
    %p41 = scmp.ne.s32.totalorder %s26, %s40
    %p42 = scmp.eq.s32.totalorder %s21, 0
    %p43 = por %p41, %p42
    %s44 = ssub.s32 %s15, %s22
    %p45 = scmp.eq.s32.totalorder %s44, 0
    %s47 = sadd.s32 %s46, 1
    %s48 = scalar_select %p45, %s46, %s47
    %p51 = pneg %p45
    %p52 = scmp.eq.s32.totalorder %s15, 1
    %p53 = por %p51, %p52
    %p54 = scmp.ne.s32.totalorder %s46, %s49
    %p55 = scmp.eq.s32.totalorder %s15, 0
    %p56 = por %p54, %p55
    %p57 = scmp.ne.s32.totalorder %s46, %s49
    %p58 = scmp.eq.s32.totalorder %s20, 1
    %p59 = por %p57, %p58
    %p60 = scmp.ne.s32.totalorder %s49, %s50
    %p61 = scmp.eq.s32.totalorder %s20, 0
    %p62 = por %p60, %p61
    %p63 = scmp.ne.s32.totalorder %s49, %s50
    %p64 = scmp.eq.s32.totalorder %s21, 1
    %p65 = por %p63, %p64
    %p67 = scmp.ne.s32.totalorder %s50, %s66
    %p68 = scmp.eq.s32.totalorder %s21, 0
    %p69 = por %p67, %p68
    %s70 = ssub.s32 %s15, %s22
    %p71 = scmp.eq.s32.totalorder %s70, 0
    %s73 = sadd.s32 %s72, 1
    %s74 = scalar_select %p71, %s72, %s73
    %p77 = pneg %p71
    %p78 = scmp.eq.s32.totalorder %s15, 1
    %p79 = por %p77, %p78
    %p80 = scmp.ne.s32.totalorder %s72, %s75
    %p81 = scmp.eq.s32.totalorder %s15, 0
    %p82 = por %p80, %p81
    %p83 = scmp.ne.s32.totalorder %s72, %s75
    %p84 = scmp.eq.s32.totalorder %s20, 1
    %p85 = por %p83, %p84
    %p86 = scmp.ne.s32.totalorder %s75, %s76
    %p87 = scmp.eq.s32.totalorder %s20, 0
    %p88 = por %p86, %p87
    %p89 = scmp.ne.s32.totalorder %s75, %s76
    %p90 = scmp.eq.s32.totalorder %s21, 1
    %p91 = por %p89, %p90
    %p93 = scmp.ne.s32.totalorder %s76, %s92
    %p94 = scmp.eq.s32.totalorder %s21, 0
    %p95 = por %p93, %p94
    %s96 = ssub.s32 %s15, %s22
    %p97 = scmp.eq.s32.totalorder %s96, 0
    %s99 = sadd.s32 %s98, 1
    %s100 = scalar_select %p97, %s98, %s99
    %p103 = pneg %p97
    %p104 = scmp.eq.s32.totalorder %s15, 1
    %p105 = por %p103, %p104
    %p106 = scmp.ne.s32.totalorder %s98, %s101
    %p107 = scmp.eq.s32.totalorder %s15, 0
    %p108 = por %p106, %p107
    %p109 = scmp.ne.s32.totalorder %s98, %s101
    %p110 = scmp.eq.s32.totalorder %s20, 1
    %p111 = por %p109, %p110
    %p112 = scmp.ne.s32.totalorder %s101, %s102
    %p113 = scmp.eq.s32.totalorder %s20, 0
    %p114 = por %p112, %p113
    %p115 = scmp.ne.s32.totalorder %s101, %s102
    %p116 = scmp.eq.s32.totalorder %s21, 1
    %p117 = por %p115, %p116
    %p119 = scmp.ne.s32.totalorder %s102, %s118
    %p120 = scmp.eq.s32.totalorder %s21, 0
    %p121 = por %p119, %p120
    %s122 = ssub.s32 %s15, %s22
    %p123 = scmp.eq.s32.totalorder %s122, 0
    %s125 = sadd.s32 %s124, 1
    %s126 = scalar_select %p123, %s124, %s125
    %p129 = pneg %p123
    %p130 = scmp.eq.s32.totalorder %s15, 1
    %p131 = por %p129, %p130
    %p132 = scmp.ne.s32.totalorder %s124, %s127
    %p133 = scmp.eq.s32.totalorder %s15, 0
    %p134 = por %p132, %p133
    %p135 = scmp.ne.s32.totalorder %s124, %s127
    %p136 = scmp.eq.s32.totalorder %s20, 1
    %p137 = por %p135, %p136
    %p138 = scmp.ne.s32.totalorder %s127, %s128
    %p139 = scmp.eq.s32.totalorder %s20, 0
    %p140 = por %p138, %p139
    %p141 = scmp.ne.s32.totalorder %s127, %s128
    %p142 = scmp.eq.s32.totalorder %s21, 1
    %p143 = por %p141, %p142
    %p145 = scmp.ne.s32.totalorder %s128, %s144
    %p146 = scmp.eq.s32.totalorder %s21, 0
    %p147 = por %p145, %p146
    %s149 = sadd.s32 %s148, 1
    %p152 = scmp.eq.s32.totalorder %s15, 1
    %p153 = scmp.ne.s32.totalorder %s148, %s150
    %p154 = scmp.eq.s32.totalorder %s15, 0
    %p155 = por %p153, %p154
    %p156 = scmp.ne.s32.totalorder %s148, %s150
    %p157 = scmp.eq.s32.totalorder %s20, 1
    %p158 = por %p156, %p157
    %p159 = scmp.ne.s32.totalorder %s150, %s151
    %p160 = scmp.eq.s32.totalorder %s20, 0
    %p161 = por %p159, %p160
    %p162 = scmp.ne.s32.totalorder %s150, %s151
    %p163 = scmp.eq.s32.totalorder %s21, 1
    %p164 = por %p162, %p163
    %p166 = scmp.ne.s32.totalorder %s151, %s165
    %p167 = scmp.eq.s32.totalorder %s21, 0
    %p168 = por %p166, %p167
    %s170 = sadd.s32 %s169, 1
    %p173 = scmp.eq.s32.totalorder %s15, 1
    %p174 = scmp.ne.s32.totalorder %s169, %s171
    %p175 = scmp.eq.s32.totalorder %s15, 0
    %p176 = por %p174, %p175
    %p177 = scmp.ne.s32.totalorder %s169, %s171
    %p178 = scmp.eq.s32.totalorder %s20, 1
    %p179 = por %p177, %p178
    %p180 = scmp.ne.s32.totalorder %s171, %s172
    %p181 = scmp.eq.s32.totalorder %s20, 0
    %p182 = por %p180, %p181
    %p183 = scmp.ne.s32.totalorder %s171, %s172
    %p184 = scmp.eq.s32.totalorder %s21, 1
    %p185 = por %p183, %p184
    %p187 = scmp.ne.s32.totalorder %s172, %s186
    %p188 = scmp.eq.s32.totalorder %s21, 0
    %p189 = por %p187, %p188
    %s191 = sadd.s32 %s190, 1
    %p194 = scmp.eq.s32.totalorder %s15, 1
    %p195 = scmp.ne.s32.totalorder %s190, %s192
    %p196 = scmp.eq.s32.totalorder %s15, 0
    %p197 = por %p195, %p196
    %p198 = scmp.ne.s32.totalorder %s190, %s192
    %p199 = scmp.eq.s32.totalorder %s20, 1
    %p200 = por %p198, %p199
    %p201 = scmp.ne.s32.totalorder %s192, %s193
    %p202 = scmp.eq.s32.totalorder %s20, 0
    %p203 = por %p201, %p202
    %p204 = scmp.ne.s32.totalorder %s192, %s193
    %p205 = scmp.eq.s32.totalorder %s21, 1
    %p206 = por %p204, %p205
    %p208 = scmp.ne.s32.totalorder %s193, %s207
    %p209 = scmp.eq.s32.totalorder %s21, 0
    %p210 = por %p208, %p209
    %s211 = ssub.s32 %s15, %s22
    %p212 = scmp.eq.s32.totalorder %s211, 0
    %s214 = sadd.s32 %s213, 1
    %s215 = scalar_select %p212, %s213, %s214
    %p218 = pneg %p212
    %p219 = scmp.eq.s32.totalorder %s15, 1
    %p220 = por %p218, %p219
    %p221 = scmp.ne.s32.totalorder %s213, %s216
    %p222 = scmp.eq.s32.totalorder %s15, 0
    %p223 = por %p221, %p222
    %p224 = scmp.ne.s32.totalorder %s213, %s216
    %p225 = scmp.eq.s32.totalorder %s20, 1
    %p226 = por %p224, %p225
    %p227 = scmp.ne.s32.totalorder %s216, %s217
    %p228 = scmp.eq.s32.totalorder %s20, 0
    %p229 = por %p227, %p228
    %p230 = scmp.ne.s32.totalorder %s216, %s217
    %p231 = scmp.eq.s32.totalorder %s21, 1
    %p232 = por %p230, %p231
    %p234 = scmp.ne.s32.totalorder %s217, %s233
    %p235 = scmp.eq.s32.totalorder %s21, 0
    %p236 = por %p234, %p235
    %p237 = scmp.le.s32.totalorder 1, %s15
    %p238 = scmp.lt.s32.totalorder %s15, 3
    %p239 = pnand %p237, %p238
    %p240 = pneg %p239
    // Predicated region
    $region9: #{vae_forward.1} parent=5 // pred_check
      _
    $region10: #{vae_forward.1} parent=5 // pred_check_branch
      %242 = sbr.rel (%p239) target = $region12
    $region11: #{vae_forward.1} parent=5 // pred_region
      %s243 = ssub.s32 %s15, 1
      // Predicated region
      $region13: #{vae_forward.1} parent=11 // pred_check
        %p244 = pneg %p36
      $region14: #{vae_forward.1} parent=11 // pred_check_branch
        %246 = sbr.rel (%p244) target = $region16
      $region15: #{vae_forward.1} parent=11 // pred_region
        _
      $region16: #{vae_forward.1} parent=11 // pred_fallthru
        _
      // Predicated region
      $region17: #{vae_forward.1} parent=11 // pred_check
        %p247 = pneg %p161
      $region18: #{vae_forward.1} parent=11 // pred_check_branch
        %249 = sbr.rel (%p247) target = $region20
      $region19: #{vae_forward.1} parent=11 // pred_region
        _
      $region20: #{vae_forward.1} parent=11 // pred_fallthru
        _
      // Predicated region
      $region21: #{vae_forward.1} parent=11 // pred_check
        %p250 = pneg %p182
      $region22: #{vae_forward.1} parent=11 // pred_check_branch
        %252 = sbr.rel (%p250) target = $region24
      $region23: #{vae_forward.1} parent=11 // pred_region
        _
      $region24: #{vae_forward.1} parent=11 // pred_fallthru
        _
      // Predicated region
      $region25: #{vae_forward.1} parent=11 // pred_check
        %p253 = pneg %p203
      $region26: #{vae_forward.1} parent=11 // pred_check_branch
        %255 = sbr.rel (%p253) target = $region28
      $region27: #{vae_forward.1} parent=11 // pred_region
        _
      $region28: #{vae_forward.1} parent=11 // pred_fallthru
        _
    $region12: #{vae_forward.1} parent=5 // pred_fallthru
      _
    %p256 = scmp.lt.s32.totalorder %s15, 2
    // Predicated region
    $region29: #{vae_forward.1} parent=5 // pred_check
      %p257 = pneg %p256
    $region30: #{vae_forward.1} parent=5 // pred_check_branch
      %259 = sbr.rel (%p257) target = $region32
    $region31: #{vae_forward.1} parent=5 // pred_region
      // Predicated region
      $region33: #{vae_forward.1} parent=31 // pred_check
        %p260 = pneg %p56
      $region34: #{vae_forward.1} parent=31 // pred_check_branch
        %262 = sbr.rel (%p260) target = $region36
      $region35: #{vae_forward.1} parent=31 // pred_region
        %s263 = smul.u32 16, %s15
        %p264 = scmp.lt.s32.totalorder %s263, 31
        %s265 = scalar_select %p264, %s263, 31
        %s266 = smul.addr %s265, 8
        %s267 = scalar_lea.vmem %s1, %s266
        %s268 = smul.u32 16, %s15
      $region36: #{vae_forward.1} parent=31 // pred_fallthru
        _
      // Predicated region
      $region37: #{vae_forward.1} parent=31 // pred_check
        %p269 = pneg %p82
      $region38: #{vae_forward.1} parent=31 // pred_check_branch
        %271 = sbr.rel (%p269) target = $region40
      $region39: #{vae_forward.1} parent=31 // pred_region
        %s272 = smul.u32 16, %s15
        %p273 = scmp.lt.s32.totalorder %s272, 31
        %s274 = scalar_select %p273, %s272, 31
        %s275 = smul.addr %s274, 8
        %s276 = scalar_lea.vmem %s2, %s275
        %s277 = smul.u32 16, %s15
      $region40: #{vae_forward.1} parent=31 // pred_fallthru
        _
      // Predicated region
      $region41: #{vae_forward.1} parent=31 // pred_check
        %p278 = pneg %p108
      $region42: #{vae_forward.1} parent=31 // pred_check_branch
        %280 = sbr.rel (%p278) target = $region44
      $region43: #{vae_forward.1} parent=31 // pred_region
        %s281 = smul.u32 16, %s15
        %p282 = scmp.lt.s32.totalorder %s281, 31
        %s283 = scalar_select %p282, %s281, 31
        %s284 = smul.addr %s283, 8
        %s285 = scalar_lea.vmem %s3, %s284
        %s286 = smul.u32 16, %s15
      $region44: #{vae_forward.1} parent=31 // pred_fallthru
        _
      // Predicated region
      $region45: #{vae_forward.1} parent=31 // pred_check
        %p287 = pneg %p134
      $region46: #{vae_forward.1} parent=31 // pred_check_branch
        %289 = sbr.rel (%p287) target = $region48
      $region47: #{vae_forward.1} parent=31 // pred_region
        %s290 = smul.u32 16, %s15
        %p291 = scmp.lt.s32.totalorder %s290, 31
        %s292 = scalar_select %p291, %s290, 31
        %s293 = smul.addr %s292, 8
        %s294 = scalar_lea.vmem %s4, %s293
        %s295 = smul.u32 16, %s15
      $region48: #{vae_forward.1} parent=31 // pred_fallthru
        _
    $region32: #{vae_forward.1} parent=5 // pred_fallthru
      _
    %p296 = scmp.le.s32.totalorder 1, %s15
    %p297 = scmp.lt.s32.totalorder %s15, 3
    %p298 = pnand %p296, %p297
    %p299 = pneg %p298
    // Predicated region
    $region49: #{vae_forward.1} parent=5 // pred_check
      _
    $region50: #{vae_forward.1} parent=5 // pred_check_branch
      %301 = sbr.rel (%p298) target = $region52
    $region51: #{vae_forward.1} parent=5 // pred_region
      %s302 = ssub.s32 %s15, 1
      %p303 = pneg %p36
      %p304 = pneg %p33
      %s305 = smul.u32 16, %s20
      %p306 = scmp.lt.s32.totalorder %s305, 31
      %s307 = scalar_select %p306, %s305, 31
      %s308 = smul.addr %s307, 8
      %s309 = scalar_lea.vmem %s1, %s308
      %p310 = pneg %p62
      %p311 = pneg %p59
      %s312 = smul.u32 16, %s20
      %p313 = scmp.lt.s32.totalorder %s312, 31
      %s314 = scalar_select %p313, %s312, 31
      %s315 = smul.addr %s314, 8
      %s316 = scalar_lea.vmem %s2, %s315
      %p317 = pneg %p88
      %p318 = pneg %p85
      %s319 = smul.u32 16, %s20
      %p320 = scmp.lt.s32.totalorder %s319, 31
      %s321 = scalar_select %p320, %s319, 31
      %s322 = smul.addr %s321, 8
      %s323 = scalar_lea.vmem %s3, %s322
      %p324 = pneg %p114
      %p325 = pneg %p111
      %s326 = smul.u32 16, %s20
      %p327 = scmp.lt.s32.totalorder %s326, 31
      %s328 = scalar_select %p327, %s326, 31
      %s329 = smul.addr %s328, 8
      %s330 = scalar_lea.vmem %s4, %s329
      %p331 = pneg %p140
      %p332 = pneg %p137
      %p333 = pneg %p161
      %p334 = pneg %p158
      %p335 = pneg %p182
      %p336 = pneg %p179
      %p337 = pneg %p203
      %p338 = pneg %p200
      %p339 = pneg %p229
      %p340 = pneg %p226
      %s341 = smul.u32 16, %s20
      %p342 = scmp.lt.s32.totalorder %s341, 31
      %s343 = scalar_select %p342, %s341, 31
      %s344 = smul.addr %s343, 2
      %s345 = smul.addr %s344, 8
      %s346 = scalar_lea.vmem %s8, %s345
      %s347 = smul.u32 16, %s20
      %p348 = scmp.lt.s32.totalorder %s347, 31
      %s349 = scalar_select %p348, %s347, 31
      %s350 = smul.addr %s349, 8
      %s351 = scalar_lea.vmem %s1, %s350
      %s352 = smul.u32 16, %s20
      %s353 = smul.u32 16, %s20
      %p354 = scmp.lt.s32.totalorder %s353, 31
      %s355 = scalar_select %p354, %s353, 31
      %s356 = smul.addr %s355, 8
      %s357 = scalar_lea.vmem %s2, %s356
      %s358 = smul.u32 16, %s20
      %s359 = smul.u32 16, %s20
      %p360 = scmp.lt.s32.totalorder %s359, 31
      %s361 = scalar_select %p360, %s359, 31
      %s362 = smul.addr %s361, 8
      %s363 = scalar_lea.vmem %s3, %s362
      %s364 = smul.u32 16, %s20
      %s365 = smul.u32 16, %s20
      %p366 = scmp.lt.s32.totalorder %s365, 31
      %s367 = scalar_select %p366, %s365, 31
      %s368 = smul.addr %s367, 8
      %s369 = scalar_lea.vmem %s4, %s368
      %s370 = smul.u32 16, %s20
      %s371 = smul.u32 16, %s20
      %p372 = scmp.lt.s32.totalorder %s371, 31
      %s373 = scalar_select %p372, %s371, 31
      %s374 = smul.addr %s373, 2
      %s375 = smul.addr %s374, 8
      %s376 = scalar_lea.vmem %s8, %s375
      %s377 = smul.u32 16, %s20
      %v378 = vld [vmem:[%s351] sm:$0xff]
      %v379 = vld [vmem:[%s351 + $0x8] sm:$0xff]
      %v380 = vld [vmem:[%s351 + $0x10] sm:$0xff]
      %v381 = vld [vmem:[%s351 + $0x18] sm:$0xff]
      %v382 = vld [vmem:[%s351 + $0x20] sm:$0xff]
      %v383 = vld [vmem:[%s351 + $0x28] sm:$0xff]
      %v384 = vld [vmem:[%s351 + $0x30] sm:$0xff]
      %v385 = vld [vmem:[%s351 + $0x38] sm:$0xff]
      %v386 = vld [vmem:[%s351 + $0x40] sm:$0xff]
      %v387 = vld [vmem:[%s351 + $0x48] sm:$0xff]
      %v388 = vld [vmem:[%s351 + $0x50] sm:$0xff]
      %v389 = vld [vmem:[%s351 + $0x58] sm:$0xff]
      %v390 = vld [vmem:[%s351 + $0x60] sm:$0xff]
      %v391 = vld [vmem:[%s351 + $0x68] sm:$0xff]
      %v392 = vld [vmem:[%s351 + $0x70] sm:$0xff]
      %v393 = vld [vmem:[%s351 + $0x78] sm:$0xff]
      %v394 = vld [vmem:[%s5] sm:$0xff]
      %v395 = vld [vmem:[%s5 + $0x8] sm:$0xff]
      %v396 = vld [vmem:[%s5 + $0x10] sm:$0xff]
      %v397 = vld [vmem:[%s5 + $0x18] sm:$0xff]
      %v398 = vld [vmem:[%s5 + $0x20] sm:$0xff]
      %v399 = vld [vmem:[%s5 + $0x28] sm:$0xff]
      %v400 = vld [vmem:[%s5 + $0x30] sm:$0xff]
      %v401 = vld [vmem:[%s5 + $0x38] sm:$0xff]
      %v402 = vld [vmem:[%s5 + $0x40] sm:$0xff]
      %v403 = vld [vmem:[%s5 + $0x48] sm:$0xff]
      %v404 = vld [vmem:[%s5 + $0x50] sm:$0xff]
      %v405 = vld [vmem:[%s5 + $0x58] sm:$0xff]
      %v406 = vld [vmem:[%s5 + $0x60] sm:$0xff]
      %v407 = vld [vmem:[%s5 + $0x68] sm:$0xff]
      %v408 = vld [vmem:[%s5 + $0x70] sm:$0xff]
      %v409 = vld [vmem:[%s5 + $0x78] sm:$0xff]
      %v410 = vld [vmem:[%s7 + $0x1] sm:$0x1]
      %v411 = vperm.slane %v410, 0
      %412 = vmatpush.msra.mxu0 %v409
      %413 = vmatpush.msra.mxu0 %v408
      %414 = vmatpush.msra.mxu0 %v407
      %415 = vmatpush.msra.mxu0 %v406
      %416 = vmatpush.msra.mxu0 %v405
      %417 = vmatpush.msra.mxu0 %v404
      %418 = vmatpush.msra.mxu0 %v403
      %419 = vmatpush.msra.mxu0 %v402
      %420 = vmatpush.msra.mxu0 %v401
      %421 = vmatpush.msra.mxu0 %v400
      %422 = vmatpush.msra.mxu0 %v399
      %423 = vmatpush.msra.mxu0 %v398
      %424 = vmatpush.msra.mxu0 %v397
      %425 = vmatpush.msra.mxu0 %v396
      %426 = vmatpush.msra.mxu0 %v395
      %427 = vmatpush.msra.mxu0 %v394
      %428 = vmatmul.f32.gmra.mxu0 %v378
      %v429 = vpop.f32.mrf.mxu0
      %v430 = vadd.f32 %v411, %v429
      %431 = vmatmul.f32.gmra.mxu0 %v379
      %v432 = vpop.f32.mrf.mxu0
      %v433 = vadd.f32 %v411, %v432
      %434 = vmatmul.f32.gmra.mxu0 %v380
      %v435 = vpop.f32.mrf.mxu0
      %v436 = vadd.f32 %v411, %v435
      %437 = vmatmul.f32.gmra.mxu0 %v381
      %v438 = vpop.f32.mrf.mxu0
      %v439 = vadd.f32 %v411, %v438
      %440 = vmatmul.f32.gmra.mxu0 %v382
      %v441 = vpop.f32.mrf.mxu0
      %v442 = vadd.f32 %v411, %v441
      %443 = vmatmul.f32.gmra.mxu0 %v383
      %v444 = vpop.f32.mrf.mxu0
      %v445 = vadd.f32 %v411, %v444
      %446 = vmatmul.f32.gmra.mxu0 %v384
      %v447 = vpop.f32.mrf.mxu0
      %v448 = vadd.f32 %v411, %v447
      %449 = vmatmul.f32.gmra.mxu0 %v385
      %v450 = vpop.f32.mrf.mxu0
      %v451 = vadd.f32 %v411, %v450
      %452 = vmatmul.f32.gmra.mxu0 %v386
      %v453 = vpop.f32.mrf.mxu0
      %v454 = vadd.f32 %v411, %v453
      %455 = vmatmul.f32.gmra.mxu0 %v387
      %v456 = vpop.f32.mrf.mxu0
      %v457 = vadd.f32 %v411, %v456
      %458 = vmatmul.f32.gmra.mxu0 %v388
      %v459 = vpop.f32.mrf.mxu0
      %v460 = vadd.f32 %v411, %v459
      %461 = vmatmul.f32.gmra.mxu0 %v389
      %v462 = vpop.f32.mrf.mxu0
      %v463 = vadd.f32 %v411, %v462
      %464 = vmatmul.f32.gmra.mxu0 %v390
      %v465 = vpop.f32.mrf.mxu0
      %v466 = vadd.f32 %v411, %v465
      %467 = vmatmul.f32.gmra.mxu0 %v391
      %v468 = vpop.f32.mrf.mxu0
      %v469 = vadd.f32 %v411, %v468
      %470 = vmatmul.f32.gmra.mxu0 %v392
      %v471 = vpop.f32.mrf.mxu0
      %v472 = vadd.f32 %v411, %v471
      %473 = vmatmul.f32.gmra.mxu0 %v393
      %v474 = vpop.f32.mrf.mxu0
      %v475 = vadd.f32 %v411, %v474
      %476 = vdwg.mxu0
      %v477 = vmax.f32 %v430, 0.0
      %v478 = vmax.f32 %v433, 0.0
      %v479 = vmax.f32 %v436, 0.0
      %v480 = vmax.f32 %v439, 0.0
      %v481 = vmax.f32 %v442, 0.0
      %v482 = vmax.f32 %v445, 0.0
      %v483 = vmax.f32 %v448, 0.0
      %v484 = vmax.f32 %v451, 0.0
      %v485 = vmax.f32 %v454, 0.0
      %v486 = vmax.f32 %v457, 0.0
      %v487 = vmax.f32 %v460, 0.0
      %v488 = vmax.f32 %v463, 0.0
      %v489 = vmax.f32 %v466, 0.0
      %v490 = vmax.f32 %v469, 0.0
      %v491 = vmax.f32 %v472, 0.0
      %v492 = vmax.f32 %v475, 0.0
      %v493 = vld [vmem:[%s5 + $0x100] sm:$0xff]
      %v494 = vld [vmem:[%s5 + $0x108] sm:$0xff]
      %v495 = vld [vmem:[%s5 + $0x110] sm:$0xff]
      %v496 = vld [vmem:[%s5 + $0x118] sm:$0xff]
      %v497 = vld [vmem:[%s7 + $0x2] sm:$0x1]
      %v498 = vperm.slane %v497, 0
      %vm499 = vcmask 261120
      %v501 = vsel %vm499, %v477, 0
      %v504 = vsel %vm499, %v478, 0
      %v507 = vsel %vm499, %v479, 0
      %v510 = vsel %vm499, %v480, 0
      %v513 = vsel %vm499, %v481, 0
      %v516 = vsel %vm499, %v482, 0
      %v519 = vsel %vm499, %v483, 0
      %v522 = vsel %vm499, %v484, 0
      %v525 = vsel %vm499, %v485, 0
      %v528 = vsel %vm499, %v486, 0
      %v531 = vsel %vm499, %v487, 0
      %v534 = vsel %vm499, %v488, 0
      %v537 = vsel %vm499, %v489, 0
      %v540 = vsel %vm499, %v490, 0
      %v543 = vsel %vm499, %v491, 0
      %v546 = vsel %vm499, %v492, 0
      %548 = vmatpush.msra.mxu0 0.0
      %549 = vmatpush.msra.mxu0 0.0
      %550 = vmatpush.msra.mxu0 0.0
      %551 = vmatpush.msra.mxu0 0.0
      %552 = vmatpush.msra.mxu0 0.0
      %553 = vmatpush.msra.mxu0 0.0
      %554 = vmatpush.msra.mxu0 0.0
      %555 = vmatpush.msra.mxu0 0.0
      %556 = vmatpush.msra.mxu0 0.0
      %557 = vmatpush.msra.mxu0 0.0
      %558 = vmatpush.msra.mxu0 0.0
      %559 = vmatpush.msra.mxu0 0.0
      %560 = vmatpush.msra.mxu0 %v496
      %561 = vmatpush.msra.mxu0 %v495
      %562 = vmatpush.msra.mxu0 %v494
      %563 = vmatpush.msra.mxu0 %v493
      %564 = vmatmul.f32.gmra.mxu0 %v501
      %v565 = vpop.f32.mrf.mxu0
      %v566 = vadd.f32 %v498, %v565
      %567 = vmatmul.f32.gmra.mxu0 %v504
      %v568 = vpop.f32.mrf.mxu0
      %v569 = vadd.f32 %v498, %v568
      %570 = vmatmul.f32.gmra.mxu0 %v507
      %v571 = vpop.f32.mrf.mxu0
      %v572 = vadd.f32 %v498, %v571
      %573 = vmatmul.f32.gmra.mxu0 %v510
      %v574 = vpop.f32.mrf.mxu0
      %v575 = vadd.f32 %v498, %v574
      %576 = vmatmul.f32.gmra.mxu0 %v513
      %v577 = vpop.f32.mrf.mxu0
      %v578 = vadd.f32 %v498, %v577
      %579 = vmatmul.f32.gmra.mxu0 %v516
      %v580 = vpop.f32.mrf.mxu0
      %v581 = vadd.f32 %v498, %v580
      %582 = vmatmul.f32.gmra.mxu0 %v519
      %v583 = vpop.f32.mrf.mxu0
      %v584 = vadd.f32 %v498, %v583
      %585 = vmatmul.f32.gmra.mxu0 %v522
      %v586 = vpop.f32.mrf.mxu0
      %v587 = vadd.f32 %v498, %v586
      %588 = vmatmul.f32.gmra.mxu0 %v525
      %v589 = vpop.f32.mrf.mxu0
      %v590 = vadd.f32 %v498, %v589
      %591 = vmatmul.f32.gmra.mxu0 %v528
      %v592 = vpop.f32.mrf.mxu0
      %v593 = vadd.f32 %v498, %v592
      %594 = vmatmul.f32.gmra.mxu0 %v531
      %v595 = vpop.f32.mrf.mxu0
      %v596 = vadd.f32 %v498, %v595
      %597 = vmatmul.f32.gmra.mxu0 %v534
      %v598 = vpop.f32.mrf.mxu0
      %v599 = vadd.f32 %v498, %v598
      %600 = vmatmul.f32.gmra.mxu0 %v537
      %v601 = vpop.f32.mrf.mxu0
      %v602 = vadd.f32 %v498, %v601
      %603 = vmatmul.f32.gmra.mxu0 %v540
      %v604 = vpop.f32.mrf.mxu0
      %v605 = vadd.f32 %v498, %v604
      %606 = vmatmul.f32.gmra.mxu0 %v543
      %v607 = vpop.f32.mrf.mxu0
      %v608 = vadd.f32 %v498, %v607
      %609 = vmatmul.f32.gmra.mxu0 %v546
      %v610 = vpop.f32.mrf.mxu0
      %v611 = vadd.f32 %v498, %v610
      %612 = vdwg.mxu0
      %v613 = vmul.f32 %v566, 0.5
      %v614 = vmul.f32 %v569, 0.5
      %v615 = vmul.f32 %v572, 0.5
      %v616 = vmul.f32 %v575, 0.5
      %v617 = vmul.f32 %v578, 0.5
      %v618 = vmul.f32 %v581, 0.5
      %v619 = vmul.f32 %v584, 0.5
      %v620 = vmul.f32 %v587, 0.5
      %v621 = vmul.f32 %v590, 0.5
      %v622 = vmul.f32 %v593, 0.5
      %v623 = vmul.f32 %v596, 0.5
      %v624 = vmul.f32 %v599, 0.5
      %v625 = vmul.f32 %v602, 0.5
      %v626 = vmul.f32 %v605, 0.5
      %v627 = vmul.f32 %v608, 0.5
      %v628 = vmul.f32 %v611, 0.5
      %v629 = vmul.f32 %v613, 1.442695
      %v630 = vpow.pop %v629
      %v631 = vmul.f32 %v614, 1.442695
      %v632 = vpow.pop %v631
      %v633 = vmul.f32 %v615, 1.442695
      %v634 = vpow.pop %v633
      %v635 = vmul.f32 %v616, 1.442695
      %v636 = vpow.pop %v635
      %v637 = vmul.f32 %v617, 1.442695
      %v638 = vpow.pop %v637
      %v639 = vmul.f32 %v618, 1.442695
      %v640 = vpow.pop %v639
      %v641 = vmul.f32 %v619, 1.442695
      %v642 = vpow.pop %v641
      %v643 = vmul.f32 %v620, 1.442695
      %v644 = vpow.pop %v643
      %v645 = vmul.f32 %v621, 1.442695
      %v646 = vpow.pop %v645
      %v647 = vmul.f32 %v622, 1.442695
      %v648 = vpow.pop %v647
      %v649 = vmul.f32 %v623, 1.442695
      %v650 = vpow.pop %v649
      %v651 = vmul.f32 %v624, 1.442695
      %v652 = vpow.pop %v651
      %v653 = vmul.f32 %v625, 1.442695
      %v654 = vpow.pop %v653
      %v655 = vmul.f32 %v626, 1.442695
      %v656 = vpow.pop %v655
      %v657 = vmul.f32 %v627, 1.442695
      %v658 = vpow.pop %v657
      %v659 = vmul.f32 %v628, 1.442695
      %v660 = vpow.pop %v659
      %v661 = vld [vmem:[%s369] sm:$0xff]
      %v662 = vld [vmem:[%s369 + $0x8] sm:$0xff]
      %v663 = vld [vmem:[%s369 + $0x10] sm:$0xff]
      %v664 = vld [vmem:[%s369 + $0x18] sm:$0xff]
      %v665 = vld [vmem:[%s369 + $0x20] sm:$0xff]
      %v666 = vld [vmem:[%s369 + $0x28] sm:$0xff]
      %v667 = vld [vmem:[%s369 + $0x30] sm:$0xff]
      %v668 = vld [vmem:[%s369 + $0x38] sm:$0xff]
      %v669 = vld [vmem:[%s369 + $0x40] sm:$0xff]
      %v670 = vld [vmem:[%s369 + $0x48] sm:$0xff]
      %v671 = vld [vmem:[%s369 + $0x50] sm:$0xff]
      %v672 = vld [vmem:[%s369 + $0x58] sm:$0xff]
      %v673 = vld [vmem:[%s369 + $0x60] sm:$0xff]
      %v674 = vld [vmem:[%s369 + $0x68] sm:$0xff]
      %v675 = vld [vmem:[%s369 + $0x70] sm:$0xff]
      %v676 = vld [vmem:[%s369 + $0x78] sm:$0xff]
      %693 = vrot.lane.b32.xlu0 %v661, 8
      %v694 = vpop.permute.xlu0 %693
      %695 = vrot.lane.b32.xlu0 %v662, 8
      %v696 = vpop.permute.xlu0 %695
      %697 = vrot.lane.b32.xlu0 %v663, 8
      %v698 = vpop.permute.xlu0 %697
      %699 = vrot.lane.b32.xlu0 %v664, 8
      %v700 = vpop.permute.xlu0 %699
      %701 = vrot.lane.b32.xlu0 %v665, 8
      %v702 = vpop.permute.xlu0 %701
      %703 = vrot.lane.b32.xlu0 %v666, 8
      %v704 = vpop.permute.xlu0 %703
      %705 = vrot.lane.b32.xlu0 %v667, 8
      %v706 = vpop.permute.xlu0 %705
      %707 = vrot.lane.b32.xlu0 %v668, 8
      %v708 = vpop.permute.xlu0 %707
      %709 = vrot.lane.b32.xlu0 %v669, 8
      %v710 = vpop.permute.xlu0 %709
      %711 = vrot.lane.b32.xlu0 %v670, 8
      %v712 = vpop.permute.xlu0 %711
      %713 = vrot.lane.b32.xlu0 %v671, 8
      %v714 = vpop.permute.xlu0 %713
      %715 = vrot.lane.b32.xlu0 %v672, 8
      %v716 = vpop.permute.xlu0 %715
      %717 = vrot.lane.b32.xlu0 %v673, 8
      %v718 = vpop.permute.xlu0 %717
      %719 = vrot.lane.b32.xlu0 %v674, 8
      %v720 = vpop.permute.xlu0 %719
      %721 = vrot.lane.b32.xlu0 %v675, 8
      %v722 = vpop.permute.xlu0 %721
      %723 = vrot.lane.b32.xlu0 %v676, 8
      %v724 = vpop.permute.xlu0 %723
      %v741 = vmul.f32 %v630, %v694
      %v742 = vmul.f32 %v632, %v696
      %v743 = vmul.f32 %v634, %v698
      %v744 = vmul.f32 %v636, %v700
      %v745 = vmul.f32 %v638, %v702
      %v746 = vmul.f32 %v640, %v704
      %v747 = vmul.f32 %v642, %v706
      %v748 = vmul.f32 %v644, %v708
      %v749 = vmul.f32 %v646, %v710
      %v750 = vmul.f32 %v648, %v712
      %v751 = vmul.f32 %v650, %v714
      %v752 = vmul.f32 %v652, %v716
      %v753 = vmul.f32 %v654, %v718
      %v754 = vmul.f32 %v656, %v720
      %v755 = vmul.f32 %v658, %v722
      %v756 = vmul.f32 %v660, %v724
      %773 = vrot.lane.b32.xlu0 %v741, 120
      %v774 = vpop.permute.xlu0 %773
      %775 = vrot.lane.b32.xlu0 %v742, 120
      %v776 = vpop.permute.xlu0 %775
      %777 = vrot.lane.b32.xlu0 %v743, 120
      %v778 = vpop.permute.xlu0 %777
      %779 = vrot.lane.b32.xlu0 %v744, 120
      %v780 = vpop.permute.xlu0 %779
      %781 = vrot.lane.b32.xlu0 %v745, 120
      %v782 = vpop.permute.xlu0 %781
      %783 = vrot.lane.b32.xlu0 %v746, 120
      %v784 = vpop.permute.xlu0 %783
      %785 = vrot.lane.b32.xlu0 %v747, 120
      %v786 = vpop.permute.xlu0 %785
      %787 = vrot.lane.b32.xlu0 %v748, 120
      %v788 = vpop.permute.xlu0 %787
      %789 = vrot.lane.b32.xlu0 %v749, 120
      %v790 = vpop.permute.xlu0 %789
      %791 = vrot.lane.b32.xlu0 %v750, 120
      %v792 = vpop.permute.xlu0 %791
      %793 = vrot.lane.b32.xlu0 %v751, 120
      %v794 = vpop.permute.xlu0 %793
      %795 = vrot.lane.b32.xlu0 %v752, 120
      %v796 = vpop.permute.xlu0 %795
      %797 = vrot.lane.b32.xlu0 %v753, 120
      %v798 = vpop.permute.xlu0 %797
      %799 = vrot.lane.b32.xlu0 %v754, 120
      %v800 = vpop.permute.xlu0 %799
      %801 = vrot.lane.b32.xlu0 %v755, 120
      %v802 = vpop.permute.xlu0 %801
      %803 = vrot.lane.b32.xlu0 %v756, 120
      %v804 = vpop.permute.xlu0 %803
      %v821 = vadd.f32 %v566, %v774
      %v822 = vadd.f32 %v569, %v776
      %v823 = vadd.f32 %v572, %v778
      %v824 = vadd.f32 %v575, %v780
      %v825 = vadd.f32 %v578, %v782
      %v826 = vadd.f32 %v581, %v784
      %v827 = vadd.f32 %v584, %v786
      %v828 = vadd.f32 %v587, %v788
      %v829 = vadd.f32 %v590, %v790
      %v830 = vadd.f32 %v593, %v792
      %v831 = vadd.f32 %v596, %v794
      %v832 = vadd.f32 %v599, %v796
      %v833 = vadd.f32 %v602, %v798
      %v834 = vadd.f32 %v605, %v800
      %v835 = vadd.f32 %v608, %v802
      %v836 = vadd.f32 %v611, %v804
      %vm837 = vcmask 130048
      %838 = vst.msk [vmem:[%s376] sm:$0xff] %vm837, %v566
      %839 = vst.msk [vmem:[%s376 + $0x10] sm:$0xff] %vm837, %v569
      %840 = vst.msk [vmem:[%s376 + $0x20] sm:$0xff] %vm837, %v572
      %841 = vst.msk [vmem:[%s376 + $0x30] sm:$0xff] %vm837, %v575
      %842 = vst.msk [vmem:[%s376 + $0x40] sm:$0xff] %vm837, %v578
      %843 = vst.msk [vmem:[%s376 + $0x50] sm:$0xff] %vm837, %v581
      %844 = vst.msk [vmem:[%s376 + $0x60] sm:$0xff] %vm837, %v584
      %845 = vst.msk [vmem:[%s376 + $0x70] sm:$0xff] %vm837, %v587
      %846 = vst.msk [vmem:[%s376 + $0x80] sm:$0xff] %vm837, %v590
      %847 = vst.msk [vmem:[%s376 + $0x90] sm:$0xff] %vm837, %v593
      %848 = vst.msk [vmem:[%s376 + $0xa0] sm:$0xff] %vm837, %v596
      %849 = vst.msk [vmem:[%s376 + $0xb0] sm:$0xff] %vm837, %v599
      %850 = vst.msk [vmem:[%s376 + $0xc0] sm:$0xff] %vm837, %v602
      %851 = vst.msk [vmem:[%s376 + $0xd0] sm:$0xff] %vm837, %v605
      %852 = vst.msk [vmem:[%s376 + $0xe0] sm:$0xff] %vm837, %v608
      %853 = vst.msk [vmem:[%s376 + $0xf0] sm:$0xff] %vm837, %v611
      %870 = vrot.lane.b32.xlu0 %v821, 16
      %v871 = vpop.permute.xlu0 %870
      %872 = vrot.lane.b32.xlu0 %v822, 16
      %v873 = vpop.permute.xlu0 %872
      %874 = vrot.lane.b32.xlu0 %v823, 16
      %v875 = vpop.permute.xlu0 %874
      %876 = vrot.lane.b32.xlu0 %v824, 16
      %v877 = vpop.permute.xlu0 %876
      %878 = vrot.lane.b32.xlu0 %v825, 16
      %v879 = vpop.permute.xlu0 %878
      %880 = vrot.lane.b32.xlu0 %v826, 16
      %v881 = vpop.permute.xlu0 %880
      %882 = vrot.lane.b32.xlu0 %v827, 16
      %v883 = vpop.permute.xlu0 %882
      %884 = vrot.lane.b32.xlu0 %v828, 16
      %v885 = vpop.permute.xlu0 %884
      %886 = vrot.lane.b32.xlu0 %v829, 16
      %v887 = vpop.permute.xlu0 %886
      %888 = vrot.lane.b32.xlu0 %v830, 16
      %v889 = vpop.permute.xlu0 %888
      %890 = vrot.lane.b32.xlu0 %v831, 16
      %v891 = vpop.permute.xlu0 %890
      %892 = vrot.lane.b32.xlu0 %v832, 16
      %v893 = vpop.permute.xlu0 %892
      %894 = vrot.lane.b32.xlu0 %v833, 16
      %v895 = vpop.permute.xlu0 %894
      %896 = vrot.lane.b32.xlu0 %v834, 16
      %v897 = vpop.permute.xlu0 %896
      %898 = vrot.lane.b32.xlu0 %v835, 16
      %v899 = vpop.permute.xlu0 %898
      %900 = vrot.lane.b32.xlu0 %v836, 16
      %v901 = vpop.permute.xlu0 %900
      %vm918 = vcmask 195712
      %919 = vst.msk [vmem:[%s376] sm:$0xff] %vm918, %v871
      %920 = vst.msk [vmem:[%s376 + $0x10] sm:$0xff] %vm918, %v873
      %921 = vst.msk [vmem:[%s376 + $0x20] sm:$0xff] %vm918, %v875
      %922 = vst.msk [vmem:[%s376 + $0x30] sm:$0xff] %vm918, %v877
      %923 = vst.msk [vmem:[%s376 + $0x40] sm:$0xff] %vm918, %v879
      %924 = vst.msk [vmem:[%s376 + $0x50] sm:$0xff] %vm918, %v881
      %925 = vst.msk [vmem:[%s376 + $0x60] sm:$0xff] %vm918, %v883
      %926 = vst.msk [vmem:[%s376 + $0x70] sm:$0xff] %vm918, %v885
      %927 = vst.msk [vmem:[%s376 + $0x80] sm:$0xff] %vm918, %v887
      %928 = vst.msk [vmem:[%s376 + $0x90] sm:$0xff] %vm918, %v889
      %929 = vst.msk [vmem:[%s376 + $0xa0] sm:$0xff] %vm918, %v891
      %930 = vst.msk [vmem:[%s376 + $0xb0] sm:$0xff] %vm918, %v893
      %931 = vst.msk [vmem:[%s376 + $0xc0] sm:$0xff] %vm918, %v895
      %932 = vst.msk [vmem:[%s376 + $0xd0] sm:$0xff] %vm918, %v897
      %933 = vst.msk [vmem:[%s376 + $0xe0] sm:$0xff] %vm918, %v899
      %934 = vst.msk [vmem:[%s376 + $0xf0] sm:$0xff] %vm918, %v901
      %vm935 = vcmask 1047744
      %936 = vst.msk [vmem:[%s376] sm:$0xff] %vm935, 0.0
      %937 = vst.msk [vmem:[%s376 + $0x10] sm:$0xff] %vm935, 0.0
      %938 = vst.msk [vmem:[%s376 + $0x20] sm:$0xff] %vm935, 0.0
      %939 = vst.msk [vmem:[%s376 + $0x30] sm:$0xff] %vm935, 0.0
      %940 = vst.msk [vmem:[%s376 + $0x40] sm:$0xff] %vm935, 0.0
      %941 = vst.msk [vmem:[%s376 + $0x50] sm:$0xff] %vm935, 0.0
      %942 = vst.msk [vmem:[%s376 + $0x60] sm:$0xff] %vm935, 0.0
      %943 = vst.msk [vmem:[%s376 + $0x70] sm:$0xff] %vm935, 0.0
      %944 = vst.msk [vmem:[%s376 + $0x80] sm:$0xff] %vm935, 0.0
      %945 = vst.msk [vmem:[%s376 + $0x90] sm:$0xff] %vm935, 0.0
      %946 = vst.msk [vmem:[%s376 + $0xa0] sm:$0xff] %vm935, 0.0
      %947 = vst.msk [vmem:[%s376 + $0xb0] sm:$0xff] %vm935, 0.0
      %948 = vst.msk [vmem:[%s376 + $0xc0] sm:$0xff] %vm935, 0.0
      %949 = vst.msk [vmem:[%s376 + $0xd0] sm:$0xff] %vm935, 0.0
      %950 = vst.msk [vmem:[%s376 + $0xe0] sm:$0xff] %vm935, 0.0
      %951 = vst.msk [vmem:[%s376 + $0xf0] sm:$0xff] %vm935, 0.0
      %v952 = vld [vmem:[%s363] sm:$0xff]
      %v953 = vld [vmem:[%s363 + $0x8] sm:$0xff]
      %v954 = vld [vmem:[%s363 + $0x10] sm:$0xff]
      %v955 = vld [vmem:[%s363 + $0x18] sm:$0xff]
      %v956 = vld [vmem:[%s363 + $0x20] sm:$0xff]
      %v957 = vld [vmem:[%s363 + $0x28] sm:$0xff]
      %v958 = vld [vmem:[%s363 + $0x30] sm:$0xff]
      %v959 = vld [vmem:[%s363 + $0x38] sm:$0xff]
      %v960 = vld [vmem:[%s363 + $0x40] sm:$0xff]
      %v961 = vld [vmem:[%s363 + $0x48] sm:$0xff]
      %v962 = vld [vmem:[%s363 + $0x50] sm:$0xff]
      %v963 = vld [vmem:[%s363 + $0x58] sm:$0xff]
      %v964 = vld [vmem:[%s363 + $0x60] sm:$0xff]
      %v965 = vld [vmem:[%s363 + $0x68] sm:$0xff]
      %v966 = vld [vmem:[%s363 + $0x70] sm:$0xff]
      %v967 = vld [vmem:[%s363 + $0x78] sm:$0xff]
      %984 = vrot.lane.b32.xlu0 %v952, 8
      %v985 = vpop.permute.xlu0 %984
      %986 = vrot.lane.b32.xlu0 %v953, 8
      %v987 = vpop.permute.xlu0 %986
      %988 = vrot.lane.b32.xlu0 %v954, 8
      %v989 = vpop.permute.xlu0 %988
      %990 = vrot.lane.b32.xlu0 %v955, 8
      %v991 = vpop.permute.xlu0 %990
      %992 = vrot.lane.b32.xlu0 %v956, 8
      %v993 = vpop.permute.xlu0 %992
      %994 = vrot.lane.b32.xlu0 %v957, 8
      %v995 = vpop.permute.xlu0 %994
      %996 = vrot.lane.b32.xlu0 %v958, 8
      %v997 = vpop.permute.xlu0 %996
      %998 = vrot.lane.b32.xlu0 %v959, 8
      %v999 = vpop.permute.xlu0 %998
      %1000 = vrot.lane.b32.xlu0 %v960, 8
      %v1001 = vpop.permute.xlu0 %1000
      %1002 = vrot.lane.b32.xlu0 %v961, 8
      %v1003 = vpop.permute.xlu0 %1002
      %1004 = vrot.lane.b32.xlu0 %v962, 8
      %v1005 = vpop.permute.xlu0 %1004
      %1006 = vrot.lane.b32.xlu0 %v963, 8
      %v1007 = vpop.permute.xlu0 %1006
      %1008 = vrot.lane.b32.xlu0 %v964, 8
      %v1009 = vpop.permute.xlu0 %1008
      %1010 = vrot.lane.b32.xlu0 %v965, 8
      %v1011 = vpop.permute.xlu0 %1010
      %1012 = vrot.lane.b32.xlu0 %v966, 8
      %v1013 = vpop.permute.xlu0 %1012
      %1014 = vrot.lane.b32.xlu0 %v967, 8
      %v1015 = vpop.permute.xlu0 %1014
      %vm1032 = vcmask 64512
      %v1033 = vsel %vm1032, %v821, %v985
      %v1034 = vsel %vm1032, %v822, %v987
      %v1035 = vsel %vm1032, %v823, %v989
      %v1036 = vsel %vm1032, %v824, %v991
      %v1037 = vsel %vm1032, %v825, %v993
      %v1038 = vsel %vm1032, %v826, %v995
      %v1039 = vsel %vm1032, %v827, %v997
      %v1040 = vsel %vm1032, %v828, %v999
      %v1041 = vsel %vm1032, %v829, %v1001
      %v1042 = vsel %vm1032, %v830, %v1003
      %v1043 = vsel %vm1032, %v831, %v1005
      %v1044 = vsel %vm1032, %v832, %v1007
      %v1045 = vsel %vm1032, %v833, %v1009
      %v1046 = vsel %vm1032, %v834, %v1011
      %v1047 = vsel %vm1032, %v835, %v1013
      %v1048 = vsel %vm1032, %v836, %v1015
      %v1049 = vld [vmem:[%s357] sm:$0xff]
      %v1050 = vld [vmem:[%s357 + $0x8] sm:$0xff]
      %v1051 = vld [vmem:[%s357 + $0x10] sm:$0xff]
      %v1052 = vld [vmem:[%s357 + $0x18] sm:$0xff]
      %v1053 = vld [vmem:[%s357 + $0x20] sm:$0xff]
      %v1054 = vld [vmem:[%s357 + $0x28] sm:$0xff]
      %v1055 = vld [vmem:[%s357 + $0x30] sm:$0xff]
      %v1056 = vld [vmem:[%s357 + $0x38] sm:$0xff]
      %v1057 = vld [vmem:[%s357 + $0x40] sm:$0xff]
      %v1058 = vld [vmem:[%s357 + $0x48] sm:$0xff]
      %v1059 = vld [vmem:[%s357 + $0x50] sm:$0xff]
      %v1060 = vld [vmem:[%s357 + $0x58] sm:$0xff]
      %v1061 = vld [vmem:[%s357 + $0x60] sm:$0xff]
      %v1062 = vld [vmem:[%s357 + $0x68] sm:$0xff]
      %v1063 = vld [vmem:[%s357 + $0x70] sm:$0xff]
      %v1064 = vld [vmem:[%s357 + $0x78] sm:$0xff]
      %v1065 = vld [vmem:[%s5 + $0x80] sm:$0xff]
      %v1066 = vld [vmem:[%s5 + $0x88] sm:$0xff]
      %v1067 = vld [vmem:[%s5 + $0x90] sm:$0xff]
      %v1068 = vld [vmem:[%s5 + $0x98] sm:$0xff]
      %v1069 = vld [vmem:[%s5 + $0xa0] sm:$0xff]
      %v1070 = vld [vmem:[%s5 + $0xa8] sm:$0xff]
      %v1071 = vld [vmem:[%s5 + $0xb0] sm:$0xff]
      %v1072 = vld [vmem:[%s5 + $0xb8] sm:$0xff]
      %v1073 = vld [vmem:[%s5 + $0xc0] sm:$0xff]
      %v1074 = vld [vmem:[%s5 + $0xc8] sm:$0xff]
      %v1075 = vld [vmem:[%s5 + $0xd0] sm:$0xff]
      %v1076 = vld [vmem:[%s5 + $0xd8] sm:$0xff]
      %v1077 = vld [vmem:[%s5 + $0xe0] sm:$0xff]
      %v1078 = vld [vmem:[%s5 + $0xe8] sm:$0xff]
      %v1079 = vld [vmem:[%s5 + $0xf0] sm:$0xff]
      %v1080 = vld [vmem:[%s5 + $0xf8] sm:$0xff]
      %v1081 = vld [vmem:[%s5 + $0x120] sm:$0xff]
      %v1082 = vld [vmem:[%s5 + $0x128] sm:$0xff]
      %v1084 = vsel %vm837, %v1033, 0
      %v1087 = vsel %vm837, %v1034, 0
      %v1090 = vsel %vm837, %v1035, 0
      %v1093 = vsel %vm837, %v1036, 0
      %v1096 = vsel %vm837, %v1037, 0
      %v1099 = vsel %vm837, %v1038, 0
      %v1102 = vsel %vm837, %v1039, 0
      %v1105 = vsel %vm837, %v1040, 0
      %v1108 = vsel %vm837, %v1041, 0
      %v1111 = vsel %vm837, %v1042, 0
      %v1114 = vsel %vm837, %v1043, 0
      %v1117 = vsel %vm837, %v1044, 0
      %v1120 = vsel %vm837, %v1045, 0
      %v1123 = vsel %vm837, %v1046, 0
      %v1126 = vsel %vm837, %v1047, 0
      %v1129 = vsel %vm837, %v1048, 0
      %1131 = vmatpush.msra.mxu0 0.0
      %1132 = vmatpush.msra.mxu0 0.0
      %1133 = vmatpush.msra.mxu0 0.0
      %1134 = vmatpush.msra.mxu0 0.0
      %1135 = vmatpush.msra.mxu0 0.0
      %1136 = vmatpush.msra.mxu0 0.0
      %1137 = vmatpush.msra.mxu0 0.0
      %1138 = vmatpush.msra.mxu0 0.0
      %1139 = vmatpush.msra.mxu0 0.0
      %1140 = vmatpush.msra.mxu0 0.0
      %1141 = vmatpush.msra.mxu0 0.0
      %1142 = vmatpush.msra.mxu0 0.0
      %1143 = vmatpush.msra.mxu0 0.0
      %1144 = vmatpush.msra.mxu0 0.0
      %1145 = vmatpush.msra.mxu0 %v1082
      %1146 = vmatpush.msra.mxu0 %v1081
      %1147 = vmatmul.f32.gmra.mxu0 %v1084
      %v1148 = vpop.f32.mrf.mxu0
      %v1149 = vadd.f32 0.0, %v1148
      %1150 = vmatmul.f32.gmra.mxu0 %v1087
      %v1151 = vpop.f32.mrf.mxu0
      %v1152 = vadd.f32 0.0, %v1151
      %1153 = vmatmul.f32.gmra.mxu0 %v1090
      %v1154 = vpop.f32.mrf.mxu0
      %v1155 = vadd.f32 0.0, %v1154
      %1156 = vmatmul.f32.gmra.mxu0 %v1093
      %v1157 = vpop.f32.mrf.mxu0
      %v1158 = vadd.f32 0.0, %v1157
      %1159 = vmatmul.f32.gmra.mxu0 %v1096
      %v1160 = vpop.f32.mrf.mxu0
      %v1161 = vadd.f32 0.0, %v1160
      %1162 = vmatmul.f32.gmra.mxu0 %v1099
      %v1163 = vpop.f32.mrf.mxu0
      %v1164 = vadd.f32 0.0, %v1163
      %1165 = vmatmul.f32.gmra.mxu0 %v1102
      %v1166 = vpop.f32.mrf.mxu0
      %v1167 = vadd.f32 0.0, %v1166
      %1168 = vmatmul.f32.gmra.mxu0 %v1105
      %v1169 = vpop.f32.mrf.mxu0
      %v1170 = vadd.f32 0.0, %v1169
      %1171 = vmatmul.f32.gmra.mxu0 %v1108
      %v1172 = vpop.f32.mrf.mxu0
      %v1173 = vadd.f32 0.0, %v1172
      %1174 = vmatmul.f32.gmra.mxu0 %v1111
      %v1175 = vpop.f32.mrf.mxu0
      %v1176 = vadd.f32 0.0, %v1175
      %1177 = vmatmul.f32.gmra.mxu0 %v1114
      %v1178 = vpop.f32.mrf.mxu0
      %v1179 = vadd.f32 0.0, %v1178
      %1180 = vmatmul.f32.gmra.mxu0 %v1117
      %v1181 = vpop.f32.mrf.mxu0
      %v1182 = vadd.f32 0.0, %v1181
      %1183 = vmatmul.f32.gmra.mxu0 %v1120
      %v1184 = vpop.f32.mrf.mxu0
      %v1185 = vadd.f32 0.0, %v1184
      %1186 = vmatmul.f32.gmra.mxu0 %v1123
      %v1187 = vpop.f32.mrf.mxu0
      %v1188 = vadd.f32 0.0, %v1187
      %1189 = vmatmul.f32.gmra.mxu0 %v1126
      %v1190 = vpop.f32.mrf.mxu0
      %v1191 = vadd.f32 0.0, %v1190
      %1192 = vmatmul.f32.gmra.mxu0 %v1129
      %v1193 = vpop.f32.mrf.mxu0
      %v1194 = vadd.f32 0.0, %v1193
      %1195 = vdwg.mxu0
      %1196 = vmatpush.msra.mxu0 %v1080
      %1197 = vmatpush.msra.mxu0 %v1079
      %1198 = vmatpush.msra.mxu0 %v1078
      %1199 = vmatpush.msra.mxu0 %v1077
      %1200 = vmatpush.msra.mxu0 %v1076
      %1201 = vmatpush.msra.mxu0 %v1075
      %1202 = vmatpush.msra.mxu0 %v1074
      %1203 = vmatpush.msra.mxu0 %v1073
      %1204 = vmatpush.msra.mxu0 %v1072
      %1205 = vmatpush.msra.mxu0 %v1071
      %1206 = vmatpush.msra.mxu0 %v1070
      %1207 = vmatpush.msra.mxu0 %v1069
      %1208 = vmatpush.msra.mxu0 %v1068
      %1209 = vmatpush.msra.mxu0 %v1067
      %1210 = vmatpush.msra.mxu0 %v1066
      %1211 = vmatpush.msra.mxu0 %v1065
      %1212 = vmatmul.f32.gmra.mxu0 %v1049
      %v1213 = vpop.f32.mrf.mxu0
      %v1214 = vadd.f32 %v1149, %v1213
      %1215 = vmatmul.f32.gmra.mxu0 %v1050
      %v1216 = vpop.f32.mrf.mxu0
      %v1217 = vadd.f32 %v1152, %v1216
      %1218 = vmatmul.f32.gmra.mxu0 %v1051
      %v1219 = vpop.f32.mrf.mxu0
      %v1220 = vadd.f32 %v1155, %v1219
      %1221 = vmatmul.f32.gmra.mxu0 %v1052
      %v1222 = vpop.f32.mrf.mxu0
      %v1223 = vadd.f32 %v1158, %v1222
      %1224 = vmatmul.f32.gmra.mxu0 %v1053
      %v1225 = vpop.f32.mrf.mxu0
      %v1226 = vadd.f32 %v1161, %v1225
      %1227 = vmatmul.f32.gmra.mxu0 %v1054
      %v1228 = vpop.f32.mrf.mxu0
      %v1229 = vadd.f32 %v1164, %v1228
      %1230 = vmatmul.f32.gmra.mxu0 %v1055
      %v1231 = vpop.f32.mrf.mxu0
      %v1232 = vadd.f32 %v1167, %v1231
      %1233 = vmatmul.f32.gmra.mxu0 %v1056
      %v1234 = vpop.f32.mrf.mxu0
      %v1235 = vadd.f32 %v1170, %v1234
      %1236 = vmatmul.f32.gmra.mxu0 %v1057
      %v1237 = vpop.f32.mrf.mxu0
      %v1238 = vadd.f32 %v1173, %v1237
      %1239 = vmatmul.f32.gmra.mxu0 %v1058
      %v1240 = vpop.f32.mrf.mxu0
      %v1241 = vadd.f32 %v1176, %v1240
      %1242 = vmatmul.f32.gmra.mxu0 %v1059
      %v1243 = vpop.f32.mrf.mxu0
      %v1244 = vadd.f32 %v1179, %v1243
      %1245 = vmatmul.f32.gmra.mxu0 %v1060
      %v1246 = vpop.f32.mrf.mxu0
      %v1247 = vadd.f32 %v1182, %v1246
      %1248 = vmatmul.f32.gmra.mxu0 %v1061
      %v1249 = vpop.f32.mrf.mxu0
      %v1250 = vadd.f32 %v1185, %v1249
      %1251 = vmatmul.f32.gmra.mxu0 %v1062
      %v1252 = vpop.f32.mrf.mxu0
      %v1253 = vadd.f32 %v1188, %v1252
      %1254 = vmatmul.f32.gmra.mxu0 %v1063
      %v1255 = vpop.f32.mrf.mxu0
      %v1256 = vadd.f32 %v1191, %v1255
      %1257 = vmatmul.f32.gmra.mxu0 %v1064
      %v1258 = vpop.f32.mrf.mxu0
      %v1259 = vadd.f32 %v1194, %v1258
      %1260 = vdwg.mxu0
      %v1261 = vmax.f32 %v1214, 0.0
      %v1262 = vmax.f32 %v1217, 0.0
      %v1263 = vmax.f32 %v1220, 0.0
      %v1264 = vmax.f32 %v1223, 0.0
      %v1265 = vmax.f32 %v1226, 0.0
      %v1266 = vmax.f32 %v1229, 0.0
      %v1267 = vmax.f32 %v1232, 0.0
      %v1268 = vmax.f32 %v1235, 0.0
      %v1269 = vmax.f32 %v1238, 0.0
      %v1270 = vmax.f32 %v1241, 0.0
      %v1271 = vmax.f32 %v1244, 0.0
      %v1272 = vmax.f32 %v1247, 0.0
      %v1273 = vmax.f32 %v1250, 0.0
      %v1274 = vmax.f32 %v1253, 0.0
      %v1275 = vmax.f32 %v1256, 0.0
      %v1276 = vmax.f32 %v1259, 0.0
      %v1277 = vld [vmem:[%s6 + $0x80] sm:$0xff]
      %v1278 = vld [vmem:[%s6 + $0x88] sm:$0xff]
      %v1279 = vld [vmem:[%s6 + $0x90] sm:$0xff]
      %v1280 = vld [vmem:[%s6 + $0x98] sm:$0xff]
      %v1281 = vld [vmem:[%s7] sm:$0x1]
      %v1282 = vperm.slane %v1281, 0
      %v1284 = vsel %vm499, %v1261, 0
      %v1287 = vsel %vm499, %v1262, 0
      %v1290 = vsel %vm499, %v1263, 0
      %v1293 = vsel %vm499, %v1264, 0
      %v1296 = vsel %vm499, %v1265, 0
      %v1299 = vsel %vm499, %v1266, 0
      %v1302 = vsel %vm499, %v1267, 0
      %v1305 = vsel %vm499, %v1268, 0
      %v1308 = vsel %vm499, %v1269, 0
      %v1311 = vsel %vm499, %v1270, 0
      %v1314 = vsel %vm499, %v1271, 0
      %v1317 = vsel %vm499, %v1272, 0
      %v1320 = vsel %vm499, %v1273, 0
      %v1323 = vsel %vm499, %v1274, 0
      %v1326 = vsel %vm499, %v1275, 0
      %v1329 = vsel %vm499, %v1276, 0
      %1331 = vmatpush.msra.mxu0 0.0
      %1332 = vmatpush.msra.mxu0 0.0
      %1333 = vmatpush.msra.mxu0 0.0
      %1334 = vmatpush.msra.mxu0 0.0
      %1335 = vmatpush.msra.mxu0 0.0
      %1336 = vmatpush.msra.mxu0 0.0
      %1337 = vmatpush.msra.mxu0 0.0
      %1338 = vmatpush.msra.mxu0 0.0
      %1339 = vmatpush.msra.mxu0 0.0
      %1340 = vmatpush.msra.mxu0 0.0
      %1341 = vmatpush.msra.mxu0 0.0
      %1342 = vmatpush.msra.mxu0 0.0
      %1343 = vmatpush.msra.mxu0 %v1280
      %1344 = vmatpush.msra.mxu0 %v1279
      %1345 = vmatpush.msra.mxu0 %v1278
      %1346 = vmatpush.msra.mxu0 %v1277
      %1347 = vmatmul.f32.gmra.mxu0 %v1284
      %v1348 = vpop.f32.mrf.mxu0
      %v1349 = vadd.f32 %v1282, %v1348
      %1350 = vmatmul.f32.gmra.mxu0 %v1287
      %v1351 = vpop.f32.mrf.mxu0
      %v1352 = vadd.f32 %v1282, %v1351
      %1353 = vmatmul.f32.gmra.mxu0 %v1290
      %v1354 = vpop.f32.mrf.mxu0
      %v1355 = vadd.f32 %v1282, %v1354
      %1356 = vmatmul.f32.gmra.mxu0 %v1293
      %v1357 = vpop.f32.mrf.mxu0
      %v1358 = vadd.f32 %v1282, %v1357
      %1359 = vmatmul.f32.gmra.mxu0 %v1296
      %v1360 = vpop.f32.mrf.mxu0
      %v1361 = vadd.f32 %v1282, %v1360
      %1362 = vmatmul.f32.gmra.mxu0 %v1299
      %v1363 = vpop.f32.mrf.mxu0
      %v1364 = vadd.f32 %v1282, %v1363
      %1365 = vmatmul.f32.gmra.mxu0 %v1302
      %v1366 = vpop.f32.mrf.mxu0
      %v1367 = vadd.f32 %v1282, %v1366
      %1368 = vmatmul.f32.gmra.mxu0 %v1305
      %v1369 = vpop.f32.mrf.mxu0
      %v1370 = vadd.f32 %v1282, %v1369
      %1371 = vmatmul.f32.gmra.mxu0 %v1308
      %v1372 = vpop.f32.mrf.mxu0
      %v1373 = vadd.f32 %v1282, %v1372
      %1374 = vmatmul.f32.gmra.mxu0 %v1311
      %v1375 = vpop.f32.mrf.mxu0
      %v1376 = vadd.f32 %v1282, %v1375
      %1377 = vmatmul.f32.gmra.mxu0 %v1314
      %v1378 = vpop.f32.mrf.mxu0
      %v1379 = vadd.f32 %v1282, %v1378
      %1380 = vmatmul.f32.gmra.mxu0 %v1317
      %v1381 = vpop.f32.mrf.mxu0
      %v1382 = vadd.f32 %v1282, %v1381
      %1383 = vmatmul.f32.gmra.mxu0 %v1320
      %v1384 = vpop.f32.mrf.mxu0
      %v1385 = vadd.f32 %v1282, %v1384
      %1386 = vmatmul.f32.gmra.mxu0 %v1323
      %v1387 = vpop.f32.mrf.mxu0
      %v1388 = vadd.f32 %v1282, %v1387
      %1389 = vmatmul.f32.gmra.mxu0 %v1326
      %v1390 = vpop.f32.mrf.mxu0
      %v1391 = vadd.f32 %v1282, %v1390
      %1392 = vmatmul.f32.gmra.mxu0 %v1329
      %v1393 = vpop.f32.mrf.mxu0
      %v1394 = vadd.f32 %v1282, %v1393
      %1395 = vdwg.mxu0
      %s1396 = sld [smem:[#allocation2]]
      %v1397 = vstv %s1396
      %v1398 = vmul.f32 %v1349, %v1397
      %v1399 = vmul.f32 %v1352, %v1397
      %v1400 = vmul.f32 %v1355, %v1397
      %v1401 = vmul.f32 %v1358, %v1397
      %v1402 = vmul.f32 %v1361, %v1397
      %v1403 = vmul.f32 %v1364, %v1397
      %v1404 = vmul.f32 %v1367, %v1397
      %v1405 = vmul.f32 %v1370, %v1397
      %v1406 = vmul.f32 %v1373, %v1397
      %v1407 = vmul.f32 %v1376, %v1397
      %v1408 = vmul.f32 %v1379, %v1397
      %v1409 = vmul.f32 %v1382, %v1397
      %v1410 = vmul.f32 %v1385, %v1397
      %v1411 = vmul.f32 %v1388, %v1397
      %v1412 = vmul.f32 %v1391, %v1397
      %v1413 = vmul.f32 %v1394, %v1397
      %v1414 = vlaneseq
      %v1415 = vand.u32 %v1414, 127
      %vm1416 = vcmp.lt.s32.totalorder %v1415, 0
      %v1417 = vsub.s32 0, %v1415
      %v1418 = vsel %vm1416, %v1417, %v1415
      %v1419 = vshrl.u32 %v1418, 4
      %v1420 = vand.u32 %v1418, 15
      %v1421 = vsub.s32 0, %v1420
      %v1422 = vsel %vm1416, %v1421, %v1420
      %vm1423 = vcmp.ne.s32.totalorder %v1422, 0
      %vm1424 = vcmp.lt.s32.totalorder %v1422, 0
      %vm1425 = vmand %vm1424, %vm1423
      %v1426 = vadd.s32 %v1422, 16
      %v1427 = vsel %vm1425, %v1426, %v1422
      %vm1428 = vcmp.ge.s32.totalorder %v1427, 1
      %1445 = vrot.lane.b32.xlu0 %v1398, 1
      %v1446 = vpop.permute.xlu0 %1445
      %1447 = vrot.lane.b32.xlu0 %v1399, 1
      %v1448 = vpop.permute.xlu0 %1447
      %1449 = vrot.lane.b32.xlu0 %v1400, 1
      %v1450 = vpop.permute.xlu0 %1449
      %1451 = vrot.lane.b32.xlu0 %v1401, 1
      %v1452 = vpop.permute.xlu0 %1451
      %1453 = vrot.lane.b32.xlu0 %v1402, 1
      %v1454 = vpop.permute.xlu0 %1453
      %1455 = vrot.lane.b32.xlu0 %v1403, 1
      %v1456 = vpop.permute.xlu0 %1455
      %1457 = vrot.lane.b32.xlu0 %v1404, 1
      %v1458 = vpop.permute.xlu0 %1457
      %1459 = vrot.lane.b32.xlu0 %v1405, 1
      %v1460 = vpop.permute.xlu0 %1459
      %1461 = vrot.lane.b32.xlu0 %v1406, 1
      %v1462 = vpop.permute.xlu0 %1461
      %1463 = vrot.lane.b32.xlu0 %v1407, 1
      %v1464 = vpop.permute.xlu0 %1463
      %1465 = vrot.lane.b32.xlu0 %v1408, 1
      %v1466 = vpop.permute.xlu0 %1465
      %1467 = vrot.lane.b32.xlu0 %v1409, 1
      %v1468 = vpop.permute.xlu0 %1467
      %1469 = vrot.lane.b32.xlu0 %v1410, 1
      %v1470 = vpop.permute.xlu0 %1469
      %1471 = vrot.lane.b32.xlu0 %v1411, 1
      %v1472 = vpop.permute.xlu0 %1471
      %1473 = vrot.lane.b32.xlu0 %v1412, 1
      %v1474 = vpop.permute.xlu0 %1473
      %1475 = vrot.lane.b32.xlu0 %v1413, 1
      %v1476 = vpop.permute.xlu0 %1475
      %1493 = vrot.lane.b32.xlu0 %v1398, 113
      %v1494 = vpop.permute.xlu0 %1493
      %1495 = vrot.lane.b32.xlu0 %v1399, 113
      %v1496 = vpop.permute.xlu0 %1495
      %1497 = vrot.lane.b32.xlu0 %v1400, 113
      %v1498 = vpop.permute.xlu0 %1497
      %1499 = vrot.lane.b32.xlu0 %v1401, 113
      %v1500 = vpop.permute.xlu0 %1499
      %1501 = vrot.lane.b32.xlu0 %v1402, 113
      %v1502 = vpop.permute.xlu0 %1501
      %1503 = vrot.lane.b32.xlu0 %v1403, 113
      %v1504 = vpop.permute.xlu0 %1503
      %1505 = vrot.lane.b32.xlu0 %v1404, 113
      %v1506 = vpop.permute.xlu0 %1505
      %1507 = vrot.lane.b32.xlu0 %v1405, 113
      %v1508 = vpop.permute.xlu0 %1507
      %1509 = vrot.lane.b32.xlu0 %v1406, 113
      %v1510 = vpop.permute.xlu0 %1509
      %1511 = vrot.lane.b32.xlu0 %v1407, 113
      %v1512 = vpop.permute.xlu0 %1511
      %1513 = vrot.lane.b32.xlu0 %v1408, 113
      %v1514 = vpop.permute.xlu0 %1513
      %1515 = vrot.lane.b32.xlu0 %v1409, 113
      %v1516 = vpop.permute.xlu0 %1515
      %1517 = vrot.lane.b32.xlu0 %v1410, 113
      %v1518 = vpop.permute.xlu0 %1517
      %1519 = vrot.lane.b32.xlu0 %v1411, 113
      %v1520 = vpop.permute.xlu0 %1519
      %1521 = vrot.lane.b32.xlu0 %v1412, 113
      %v1522 = vpop.permute.xlu0 %1521
      %1523 = vrot.lane.b32.xlu0 %v1413, 113
      %v1524 = vpop.permute.xlu0 %1523
      %v1541 = vsel %vm1428, %v1446, %v1494
      %v1542 = vsel %vm1428, %v1448, %v1496
      %v1543 = vsel %vm1428, %v1450, %v1498
      %v1544 = vsel %vm1428, %v1452, %v1500
      %v1545 = vsel %vm1428, %v1454, %v1502
      %v1546 = vsel %vm1428, %v1456, %v1504
      %v1547 = vsel %vm1428, %v1458, %v1506
      %v1548 = vsel %vm1428, %v1460, %v1508
      %v1549 = vsel %vm1428, %v1462, %v1510
      %v1550 = vsel %vm1428, %v1464, %v1512
      %v1551 = vsel %vm1428, %v1466, %v1514
      %v1552 = vsel %vm1428, %v1468, %v1516
      %v1553 = vsel %vm1428, %v1470, %v1518
      %v1554 = vsel %vm1428, %v1472, %v1520
      %v1555 = vsel %vm1428, %v1474, %v1522
      %v1556 = vsel %vm1428, %v1476, %v1524
      %v1557 = vmax.f32 %v1398, %v1541
      %v1558 = vmax.f32 %v1399, %v1542
      %v1559 = vmax.f32 %v1400, %v1543
      %v1560 = vmax.f32 %v1401, %v1544
      %v1561 = vmax.f32 %v1402, %v1545
      %v1562 = vmax.f32 %v1403, %v1546
      %v1563 = vmax.f32 %v1404, %v1547
      %v1564 = vmax.f32 %v1405, %v1548
      %v1565 = vmax.f32 %v1406, %v1549
      %v1566 = vmax.f32 %v1407, %v1550
      %v1567 = vmax.f32 %v1408, %v1551
      %v1568 = vmax.f32 %v1409, %v1552
      %v1569 = vmax.f32 %v1410, %v1553
      %v1570 = vmax.f32 %v1411, %v1554
      %v1571 = vmax.f32 %v1412, %v1555
      %v1572 = vmax.f32 %v1413, %v1556
      %vm1573 = vcmp.ge.s32.totalorder %v1427, 2
      %1590 = vrot.lane.b32.xlu0 %v1557, 2
      %v1591 = vpop.permute.xlu0 %1590
      %1592 = vrot.lane.b32.xlu0 %v1558, 2
      %v1593 = vpop.permute.xlu0 %1592
      %1594 = vrot.lane.b32.xlu0 %v1559, 2
      %v1595 = vpop.permute.xlu0 %1594
      %1596 = vrot.lane.b32.xlu0 %v1560, 2
      %v1597 = vpop.permute.xlu0 %1596
      %1598 = vrot.lane.b32.xlu0 %v1561, 2
      %v1599 = vpop.permute.xlu0 %1598
      %1600 = vrot.lane.b32.xlu0 %v1562, 2
      %v1601 = vpop.permute.xlu0 %1600
      %1602 = vrot.lane.b32.xlu0 %v1563, 2
      %v1603 = vpop.permute.xlu0 %1602
      %1604 = vrot.lane.b32.xlu0 %v1564, 2
      %v1605 = vpop.permute.xlu0 %1604
      %1606 = vrot.lane.b32.xlu0 %v1565, 2
      %v1607 = vpop.permute.xlu0 %1606
      %1608 = vrot.lane.b32.xlu0 %v1566, 2
      %v1609 = vpop.permute.xlu0 %1608
      %1610 = vrot.lane.b32.xlu0 %v1567, 2
      %v1611 = vpop.permute.xlu0 %1610
      %1612 = vrot.lane.b32.xlu0 %v1568, 2
      %v1613 = vpop.permute.xlu0 %1612
      %1614 = vrot.lane.b32.xlu0 %v1569, 2
      %v1615 = vpop.permute.xlu0 %1614
      %1616 = vrot.lane.b32.xlu0 %v1570, 2
      %v1617 = vpop.permute.xlu0 %1616
      %1618 = vrot.lane.b32.xlu0 %v1571, 2
      %v1619 = vpop.permute.xlu0 %1618
      %1620 = vrot.lane.b32.xlu0 %v1572, 2
      %v1621 = vpop.permute.xlu0 %1620
      %1638 = vrot.lane.b32.xlu0 %v1557, 114
      %v1639 = vpop.permute.xlu0 %1638
      %1640 = vrot.lane.b32.xlu0 %v1558, 114
      %v1641 = vpop.permute.xlu0 %1640
      %1642 = vrot.lane.b32.xlu0 %v1559, 114
      %v1643 = vpop.permute.xlu0 %1642
      %1644 = vrot.lane.b32.xlu0 %v1560, 114
      %v1645 = vpop.permute.xlu0 %1644
      %1646 = vrot.lane.b32.xlu0 %v1561, 114
      %v1647 = vpop.permute.xlu0 %1646
      %1648 = vrot.lane.b32.xlu0 %v1562, 114
      %v1649 = vpop.permute.xlu0 %1648
      %1650 = vrot.lane.b32.xlu0 %v1563, 114
      %v1651 = vpop.permute.xlu0 %1650
      %1652 = vrot.lane.b32.xlu0 %v1564, 114
      %v1653 = vpop.permute.xlu0 %1652
      %1654 = vrot.lane.b32.xlu0 %v1565, 114
      %v1655 = vpop.permute.xlu0 %1654
      %1656 = vrot.lane.b32.xlu0 %v1566, 114
      %v1657 = vpop.permute.xlu0 %1656
      %1658 = vrot.lane.b32.xlu0 %v1567, 114
      %v1659 = vpop.permute.xlu0 %1658
      %1660 = vrot.lane.b32.xlu0 %v1568, 114
      %v1661 = vpop.permute.xlu0 %1660
      %1662 = vrot.lane.b32.xlu0 %v1569, 114
      %v1663 = vpop.permute.xlu0 %1662
      %1664 = vrot.lane.b32.xlu0 %v1570, 114
      %v1665 = vpop.permute.xlu0 %1664
      %1666 = vrot.lane.b32.xlu0 %v1571, 114
      %v1667 = vpop.permute.xlu0 %1666
      %1668 = vrot.lane.b32.xlu0 %v1572, 114
      %v1669 = vpop.permute.xlu0 %1668
      %v1686 = vsel %vm1573, %v1591, %v1639
      %v1687 = vsel %vm1573, %v1593, %v1641
      %v1688 = vsel %vm1573, %v1595, %v1643
      %v1689 = vsel %vm1573, %v1597, %v1645
      %v1690 = vsel %vm1573, %v1599, %v1647
      %v1691 = vsel %vm1573, %v1601, %v1649
      %v1692 = vsel %vm1573, %v1603, %v1651
      %v1693 = vsel %vm1573, %v1605, %v1653
      %v1694 = vsel %vm1573, %v1607, %v1655
      %v1695 = vsel %vm1573, %v1609, %v1657
      %v1696 = vsel %vm1573, %v1611, %v1659
      %v1697 = vsel %vm1573, %v1613, %v1661
      %v1698 = vsel %vm1573, %v1615, %v1663
      %v1699 = vsel %vm1573, %v1617, %v1665
      %v1700 = vsel %vm1573, %v1619, %v1667
      %v1701 = vsel %vm1573, %v1621, %v1669
      %v1702 = vmax.f32 %v1557, %v1686
      %v1703 = vmax.f32 %v1558, %v1687
      %v1704 = vmax.f32 %v1559, %v1688
      %v1705 = vmax.f32 %v1560, %v1689
      %v1706 = vmax.f32 %v1561, %v1690
      %v1707 = vmax.f32 %v1562, %v1691
      %v1708 = vmax.f32 %v1563, %v1692
      %v1709 = vmax.f32 %v1564, %v1693
      %v1710 = vmax.f32 %v1565, %v1694
      %v1711 = vmax.f32 %v1566, %v1695
      %v1712 = vmax.f32 %v1567, %v1696
      %v1713 = vmax.f32 %v1568, %v1697
      %v1714 = vmax.f32 %v1569, %v1698
      %v1715 = vmax.f32 %v1570, %v1699
      %v1716 = vmax.f32 %v1571, %v1700
      %v1717 = vmax.f32 %v1572, %v1701
      %vm1718 = vcmp.ge.s32.totalorder %v1427, 4
      %1735 = vrot.lane.b32.xlu0 %v1702, 4
      %v1736 = vpop.permute.xlu0 %1735
      %1737 = vrot.lane.b32.xlu0 %v1703, 4
      %v1738 = vpop.permute.xlu0 %1737
      %1739 = vrot.lane.b32.xlu0 %v1704, 4
      %v1740 = vpop.permute.xlu0 %1739
      %1741 = vrot.lane.b32.xlu0 %v1705, 4
      %v1742 = vpop.permute.xlu0 %1741
      %1743 = vrot.lane.b32.xlu0 %v1706, 4
      %v1744 = vpop.permute.xlu0 %1743
      %1745 = vrot.lane.b32.xlu0 %v1707, 4
      %v1746 = vpop.permute.xlu0 %1745
      %1747 = vrot.lane.b32.xlu0 %v1708, 4
      %v1748 = vpop.permute.xlu0 %1747
      %1749 = vrot.lane.b32.xlu0 %v1709, 4
      %v1750 = vpop.permute.xlu0 %1749
      %1751 = vrot.lane.b32.xlu0 %v1710, 4
      %v1752 = vpop.permute.xlu0 %1751
      %1753 = vrot.lane.b32.xlu0 %v1711, 4
      %v1754 = vpop.permute.xlu0 %1753
      %1755 = vrot.lane.b32.xlu0 %v1712, 4
      %v1756 = vpop.permute.xlu0 %1755
      %1757 = vrot.lane.b32.xlu0 %v1713, 4
      %v1758 = vpop.permute.xlu0 %1757
      %1759 = vrot.lane.b32.xlu0 %v1714, 4
      %v1760 = vpop.permute.xlu0 %1759
      %1761 = vrot.lane.b32.xlu0 %v1715, 4
      %v1762 = vpop.permute.xlu0 %1761
      %1763 = vrot.lane.b32.xlu0 %v1716, 4
      %v1764 = vpop.permute.xlu0 %1763
      %1765 = vrot.lane.b32.xlu0 %v1717, 4
      %v1766 = vpop.permute.xlu0 %1765
      %1783 = vrot.lane.b32.xlu0 %v1702, 116
      %v1784 = vpop.permute.xlu0 %1783
      %1785 = vrot.lane.b32.xlu0 %v1703, 116
      %v1786 = vpop.permute.xlu0 %1785
      %1787 = vrot.lane.b32.xlu0 %v1704, 116
      %v1788 = vpop.permute.xlu0 %1787
      %1789 = vrot.lane.b32.xlu0 %v1705, 116
      %v1790 = vpop.permute.xlu0 %1789
      %1791 = vrot.lane.b32.xlu0 %v1706, 116
      %v1792 = vpop.permute.xlu0 %1791
      %1793 = vrot.lane.b32.xlu0 %v1707, 116
      %v1794 = vpop.permute.xlu0 %1793
      %1795 = vrot.lane.b32.xlu0 %v1708, 116
      %v1796 = vpop.permute.xlu0 %1795
      %1797 = vrot.lane.b32.xlu0 %v1709, 116
      %v1798 = vpop.permute.xlu0 %1797
      %1799 = vrot.lane.b32.xlu0 %v1710, 116
      %v1800 = vpop.permute.xlu0 %1799
      %1801 = vrot.lane.b32.xlu0 %v1711, 116
      %v1802 = vpop.permute.xlu0 %1801
      %1803 = vrot.lane.b32.xlu0 %v1712, 116
      %v1804 = vpop.permute.xlu0 %1803
      %1805 = vrot.lane.b32.xlu0 %v1713, 116
      %v1806 = vpop.permute.xlu0 %1805
      %1807 = vrot.lane.b32.xlu0 %v1714, 116
      %v1808 = vpop.permute.xlu0 %1807
      %1809 = vrot.lane.b32.xlu0 %v1715, 116
      %v1810 = vpop.permute.xlu0 %1809
      %1811 = vrot.lane.b32.xlu0 %v1716, 116
      %v1812 = vpop.permute.xlu0 %1811
      %1813 = vrot.lane.b32.xlu0 %v1717, 116
      %v1814 = vpop.permute.xlu0 %1813
      %v1831 = vsel %vm1718, %v1736, %v1784
      %v1832 = vsel %vm1718, %v1738, %v1786
      %v1833 = vsel %vm1718, %v1740, %v1788
      %v1834 = vsel %vm1718, %v1742, %v1790
      %v1835 = vsel %vm1718, %v1744, %v1792
      %v1836 = vsel %vm1718, %v1746, %v1794
      %v1837 = vsel %vm1718, %v1748, %v1796
      %v1838 = vsel %vm1718, %v1750, %v1798
      %v1839 = vsel %vm1718, %v1752, %v1800
      %v1840 = vsel %vm1718, %v1754, %v1802
      %v1841 = vsel %vm1718, %v1756, %v1804
      %v1842 = vsel %vm1718, %v1758, %v1806
      %v1843 = vsel %vm1718, %v1760, %v1808
      %v1844 = vsel %vm1718, %v1762, %v1810
      %v1845 = vsel %vm1718, %v1764, %v1812
      %v1846 = vsel %vm1718, %v1766, %v1814
      %v1847 = vmax.f32 %v1702, %v1831
      %v1848 = vmax.f32 %v1703, %v1832
      %v1849 = vmax.f32 %v1704, %v1833
      %v1850 = vmax.f32 %v1705, %v1834
      %v1851 = vmax.f32 %v1706, %v1835
      %v1852 = vmax.f32 %v1707, %v1836
      %v1853 = vmax.f32 %v1708, %v1837
      %v1854 = vmax.f32 %v1709, %v1838
      %v1855 = vmax.f32 %v1710, %v1839
      %v1856 = vmax.f32 %v1711, %v1840
      %v1857 = vmax.f32 %v1712, %v1841
      %v1858 = vmax.f32 %v1713, %v1842
      %v1859 = vmax.f32 %v1714, %v1843
      %v1860 = vmax.f32 %v1715, %v1844
      %v1861 = vmax.f32 %v1716, %v1845
      %v1862 = vmax.f32 %v1717, %v1846
      %vm1863 = vcmp.ge.s32.totalorder %v1427, 8
      %1880 = vrot.lane.b32.xlu0 %v1847, 8
      %v1881 = vpop.permute.xlu0 %1880
      %1882 = vrot.lane.b32.xlu0 %v1848, 8
      %v1883 = vpop.permute.xlu0 %1882
      %1884 = vrot.lane.b32.xlu0 %v1849, 8
      %v1885 = vpop.permute.xlu0 %1884
      %1886 = vrot.lane.b32.xlu0 %v1850, 8
      %v1887 = vpop.permute.xlu0 %1886
      %1888 = vrot.lane.b32.xlu0 %v1851, 8
      %v1889 = vpop.permute.xlu0 %1888
      %1890 = vrot.lane.b32.xlu0 %v1852, 8
      %v1891 = vpop.permute.xlu0 %1890
      %1892 = vrot.lane.b32.xlu0 %v1853, 8
      %v1893 = vpop.permute.xlu0 %1892
      %1894 = vrot.lane.b32.xlu0 %v1854, 8
      %v1895 = vpop.permute.xlu0 %1894
      %1896 = vrot.lane.b32.xlu0 %v1855, 8
      %v1897 = vpop.permute.xlu0 %1896
      %1898 = vrot.lane.b32.xlu0 %v1856, 8
      %v1899 = vpop.permute.xlu0 %1898
      %1900 = vrot.lane.b32.xlu0 %v1857, 8
      %v1901 = vpop.permute.xlu0 %1900
      %1902 = vrot.lane.b32.xlu0 %v1858, 8
      %v1903 = vpop.permute.xlu0 %1902
      %1904 = vrot.lane.b32.xlu0 %v1859, 8
      %v1905 = vpop.permute.xlu0 %1904
      %1906 = vrot.lane.b32.xlu0 %v1860, 8
      %v1907 = vpop.permute.xlu0 %1906
      %1908 = vrot.lane.b32.xlu0 %v1861, 8
      %v1909 = vpop.permute.xlu0 %1908
      %1910 = vrot.lane.b32.xlu0 %v1862, 8
      %v1911 = vpop.permute.xlu0 %1910
      %1928 = vrot.lane.b32.xlu0 %v1847, 120
      %v1929 = vpop.permute.xlu0 %1928
      %1930 = vrot.lane.b32.xlu0 %v1848, 120
      %v1931 = vpop.permute.xlu0 %1930
      %1932 = vrot.lane.b32.xlu0 %v1849, 120
      %v1933 = vpop.permute.xlu0 %1932
      %1934 = vrot.lane.b32.xlu0 %v1850, 120
      %v1935 = vpop.permute.xlu0 %1934
      %1936 = vrot.lane.b32.xlu0 %v1851, 120
      %v1937 = vpop.permute.xlu0 %1936
      %1938 = vrot.lane.b32.xlu0 %v1852, 120
      %v1939 = vpop.permute.xlu0 %1938
      %1940 = vrot.lane.b32.xlu0 %v1853, 120
      %v1941 = vpop.permute.xlu0 %1940
      %1942 = vrot.lane.b32.xlu0 %v1854, 120
      %v1943 = vpop.permute.xlu0 %1942
      %1944 = vrot.lane.b32.xlu0 %v1855, 120
      %v1945 = vpop.permute.xlu0 %1944
      %1946 = vrot.lane.b32.xlu0 %v1856, 120
      %v1947 = vpop.permute.xlu0 %1946
      %1948 = vrot.lane.b32.xlu0 %v1857, 120
      %v1949 = vpop.permute.xlu0 %1948
      %1950 = vrot.lane.b32.xlu0 %v1858, 120
      %v1951 = vpop.permute.xlu0 %1950
      %1952 = vrot.lane.b32.xlu0 %v1859, 120
      %v1953 = vpop.permute.xlu0 %1952
      %1954 = vrot.lane.b32.xlu0 %v1860, 120
      %v1955 = vpop.permute.xlu0 %1954
      %1956 = vrot.lane.b32.xlu0 %v1861, 120
      %v1957 = vpop.permute.xlu0 %1956
      %1958 = vrot.lane.b32.xlu0 %v1862, 120
      %v1959 = vpop.permute.xlu0 %1958
      %v1976 = vsel %vm1863, %v1881, %v1929
      %v1977 = vsel %vm1863, %v1883, %v1931
      %v1978 = vsel %vm1863, %v1885, %v1933
      %v1979 = vsel %vm1863, %v1887, %v1935
      %v1980 = vsel %vm1863, %v1889, %v1937
      %v1981 = vsel %vm1863, %v1891, %v1939
      %v1982 = vsel %vm1863, %v1893, %v1941
      %v1983 = vsel %vm1863, %v1895, %v1943
      %v1984 = vsel %vm1863, %v1897, %v1945
      %v1985 = vsel %vm1863, %v1899, %v1947
      %v1986 = vsel %vm1863, %v1901, %v1949
      %v1987 = vsel %vm1863, %v1903, %v1951
      %v1988 = vsel %vm1863, %v1905, %v1953
      %v1989 = vsel %vm1863, %v1907, %v1955
      %v1990 = vsel %vm1863, %v1909, %v1957
      %v1991 = vsel %vm1863, %v1911, %v1959
      %v1992 = vmax.f32 %v1847, %v1976
      %v1993 = vmax.f32 %v1848, %v1977
      %v1994 = vmax.f32 %v1849, %v1978
      %v1995 = vmax.f32 %v1850, %v1979
      %v1996 = vmax.f32 %v1851, %v1980
      %v1997 = vmax.f32 %v1852, %v1981
      %v1998 = vmax.f32 %v1853, %v1982
      %v1999 = vmax.f32 %v1854, %v1983
      %v2000 = vmax.f32 %v1855, %v1984
      %v2001 = vmax.f32 %v1856, %v1985
      %v2002 = vmax.f32 %v1857, %v1986
      %v2003 = vmax.f32 %v1858, %v1987
      %v2004 = vmax.f32 %v1859, %v1988
      %v2005 = vmax.f32 %v1860, %v1989
      %v2006 = vmax.f32 %v1861, %v1990
      %v2007 = vmax.f32 %v1862, %v1991
      %v2008 = vsub.f32 %v1398, %v1992
      %v2009 = vsub.f32 %v1399, %v1993
      %v2010 = vsub.f32 %v1400, %v1994
      %v2011 = vsub.f32 %v1401, %v1995
      %v2012 = vsub.f32 %v1402, %v1996
      %v2013 = vsub.f32 %v1403, %v1997
      %v2014 = vsub.f32 %v1404, %v1998
      %v2015 = vsub.f32 %v1405, %v1999
      %v2016 = vsub.f32 %v1406, %v2000
      %v2017 = vsub.f32 %v1407, %v2001
      %v2018 = vsub.f32 %v1408, %v2002
      %v2019 = vsub.f32 %v1409, %v2003
      %v2020 = vsub.f32 %v1410, %v2004
      %v2021 = vsub.f32 %v1411, %v2005
      %v2022 = vsub.f32 %v1412, %v2006
      %v2023 = vsub.f32 %v1413, %v2007
      %v2024 = vmul.f32 %v2008, 1.442695
      %v2025 = vpow.pop %v2024
      %v2026 = vmul.f32 %v2009, 1.442695
      %v2027 = vpow.pop %v2026
      %v2028 = vmul.f32 %v2010, 1.442695
      %v2029 = vpow.pop %v2028
      %v2030 = vmul.f32 %v2011, 1.442695
      %v2031 = vpow.pop %v2030
      %v2032 = vmul.f32 %v2012, 1.442695
      %v2033 = vpow.pop %v2032
      %v2034 = vmul.f32 %v2013, 1.442695
      %v2035 = vpow.pop %v2034
      %v2036 = vmul.f32 %v2014, 1.442695
      %v2037 = vpow.pop %v2036
      %v2038 = vmul.f32 %v2015, 1.442695
      %v2039 = vpow.pop %v2038
      %v2040 = vmul.f32 %v2016, 1.442695
      %v2041 = vpow.pop %v2040
      %v2042 = vmul.f32 %v2017, 1.442695
      %v2043 = vpow.pop %v2042
      %v2044 = vmul.f32 %v2018, 1.442695
      %v2045 = vpow.pop %v2044
      %v2046 = vmul.f32 %v2019, 1.442695
      %v2047 = vpow.pop %v2046
      %v2048 = vmul.f32 %v2020, 1.442695
      %v2049 = vpow.pop %v2048
      %v2050 = vmul.f32 %v2021, 1.442695
      %v2051 = vpow.pop %v2050
      %v2052 = vmul.f32 %v2022, 1.442695
      %v2053 = vpow.pop %v2052
      %v2054 = vmul.f32 %v2023, 1.442695
      %v2055 = vpow.pop %v2054
      %v2056 = vld [vmem:[%s6] sm:$0xff]
      %v2057 = vld [vmem:[%s6 + $0x8] sm:$0xff]
      %v2058 = vld [vmem:[%s6 + $0x10] sm:$0xff]
      %v2059 = vld [vmem:[%s6 + $0x18] sm:$0xff]
      %v2060 = vld [vmem:[%s6 + $0x20] sm:$0xff]
      %v2061 = vld [vmem:[%s6 + $0x28] sm:$0xff]
      %v2062 = vld [vmem:[%s6 + $0x30] sm:$0xff]
      %v2063 = vld [vmem:[%s6 + $0x38] sm:$0xff]
      %v2064 = vld [vmem:[%s6 + $0x40] sm:$0xff]
      %v2065 = vld [vmem:[%s6 + $0x48] sm:$0xff]
      %v2066 = vld [vmem:[%s6 + $0x50] sm:$0xff]
      %v2067 = vld [vmem:[%s6 + $0x58] sm:$0xff]
      %v2068 = vld [vmem:[%s6 + $0x60] sm:$0xff]
      %v2069 = vld [vmem:[%s6 + $0x68] sm:$0xff]
      %v2070 = vld [vmem:[%s6 + $0x70] sm:$0xff]
      %v2071 = vld [vmem:[%s6 + $0x78] sm:$0xff]
      %2072 = vmatpush.msra.mxu0 %v2071
      %2073 = vmatpush.msra.mxu0 %v2070
      %2074 = vmatpush.msra.mxu0 %v2069
      %2075 = vmatpush.msra.mxu0 %v2068
      %2076 = vmatpush.msra.mxu0 %v2067
      %2077 = vmatpush.msra.mxu0 %v2066
      %2078 = vmatpush.msra.mxu0 %v2065
      %2079 = vmatpush.msra.mxu0 %v2064
      %2080 = vmatpush.msra.mxu0 %v2063
      %2081 = vmatpush.msra.mxu0 %v2062
      %2082 = vmatpush.msra.mxu0 %v2061
      %2083 = vmatpush.msra.mxu0 %v2060
      %2084 = vmatpush.msra.mxu0 %v2059
      %2085 = vmatpush.msra.mxu0 %v2058
      %2086 = vmatpush.msra.mxu0 %v2057
      %2087 = vmatpush.msra.mxu0 %v2056
      %2088 = vmatmul.f32.gmra.mxu0 %v2025
      %v2089 = vpop.f32.mrf.mxu0
      %v2090 = vadd.f32 0.0, %v2089
      %2091 = vmatmul.f32.gmra.mxu0 %v2027
      %v2092 = vpop.f32.mrf.mxu0
      %v2093 = vadd.f32 0.0, %v2092
      %2094 = vmatmul.f32.gmra.mxu0 %v2029
      %v2095 = vpop.f32.mrf.mxu0
      %v2096 = vadd.f32 0.0, %v2095
      %2097 = vmatmul.f32.gmra.mxu0 %v2031
      %v2098 = vpop.f32.mrf.mxu0
      %v2099 = vadd.f32 0.0, %v2098
      %2100 = vmatmul.f32.gmra.mxu0 %v2033
      %v2101 = vpop.f32.mrf.mxu0
      %v2102 = vadd.f32 0.0, %v2101
      %2103 = vmatmul.f32.gmra.mxu0 %v2035
      %v2104 = vpop.f32.mrf.mxu0
      %v2105 = vadd.f32 0.0, %v2104
      %2106 = vmatmul.f32.gmra.mxu0 %v2037
      %v2107 = vpop.f32.mrf.mxu0
      %v2108 = vadd.f32 0.0, %v2107
      %2109 = vmatmul.f32.gmra.mxu0 %v2039
      %v2110 = vpop.f32.mrf.mxu0
      %v2111 = vadd.f32 0.0, %v2110
      %2112 = vmatmul.f32.gmra.mxu0 %v2041
      %v2113 = vpop.f32.mrf.mxu0
      %v2114 = vadd.f32 0.0, %v2113
      %2115 = vmatmul.f32.gmra.mxu0 %v2043
      %v2116 = vpop.f32.mrf.mxu0
      %v2117 = vadd.f32 0.0, %v2116
      %2118 = vmatmul.f32.gmra.mxu0 %v2045
      %v2119 = vpop.f32.mrf.mxu0
      %v2120 = vadd.f32 0.0, %v2119
      %2121 = vmatmul.f32.gmra.mxu0 %v2047
      %v2122 = vpop.f32.mrf.mxu0
      %v2123 = vadd.f32 0.0, %v2122
      %2124 = vmatmul.f32.gmra.mxu0 %v2049
      %v2125 = vpop.f32.mrf.mxu0
      %v2126 = vadd.f32 0.0, %v2125
      %2127 = vmatmul.f32.gmra.mxu0 %v2051
      %v2128 = vpop.f32.mrf.mxu0
      %v2129 = vadd.f32 0.0, %v2128
      %2130 = vmatmul.f32.gmra.mxu0 %v2053
      %v2131 = vpop.f32.mrf.mxu0
      %v2132 = vadd.f32 0.0, %v2131
      %2133 = vmatmul.f32.gmra.mxu0 %v2055
      %v2134 = vpop.f32.mrf.mxu0
      %v2135 = vadd.f32 0.0, %v2134
      %2136 = vdwg.mxu0
      %v2137 = vrcp.pop %v2090
      %v2138 = vmul.f32 %v2090, %v2137
      %v2139 = vsub.f32 1.0, %v2138
      %v2140 = vmul.f32 %v2137, %v2139
      %v2141 = vadd.f32 %v2137, %v2140
      %vm2142 = vweird.f32 %v2090
      %vm2143 = vweird.f32 %v2137
      %vm2144 = vmor %vm2142, %vm2143
      %v2145 = vsel %vm2144, %v2137, %v2141
      %v2146 = vand.u32 2147483647, %v2090
      %vm2147 = vcmp.eq.f32.partialorder %v2146, 8.507059e+37
      %v2148 = vand.u32 %v2090, 2147483648
      %v2149 = vor.u32 1.1754944e-38, %v2148
      %v2150 = vsel %vm2147, %v2149, %v2145
      %v2151 = vrcp.pop %v2093
      %v2152 = vmul.f32 %v2093, %v2151
      %v2153 = vsub.f32 1.0, %v2152
      %v2154 = vmul.f32 %v2151, %v2153
      %v2155 = vadd.f32 %v2151, %v2154
      %vm2156 = vweird.f32 %v2093
      %vm2157 = vweird.f32 %v2151
      %vm2158 = vmor %vm2156, %vm2157
      %v2159 = vsel %vm2158, %v2151, %v2155
      %v2160 = vand.u32 2147483647, %v2093
      %vm2161 = vcmp.eq.f32.partialorder %v2160, 8.507059e+37
      %v2162 = vand.u32 %v2093, 2147483648
      %v2163 = vor.u32 1.1754944e-38, %v2162
      %v2164 = vsel %vm2161, %v2163, %v2159
      %v2165 = vrcp.pop %v2096
      %v2166 = vmul.f32 %v2096, %v2165
      %v2167 = vsub.f32 1.0, %v2166
      %v2168 = vmul.f32 %v2165, %v2167
      %v2169 = vadd.f32 %v2165, %v2168
      %vm2170 = vweird.f32 %v2096
      %vm2171 = vweird.f32 %v2165
      %vm2172 = vmor %vm2170, %vm2171
      %v2173 = vsel %vm2172, %v2165, %v2169
      %v2174 = vand.u32 2147483647, %v2096
      %vm2175 = vcmp.eq.f32.partialorder %v2174, 8.507059e+37
      %v2176 = vand.u32 %v2096, 2147483648
      %v2177 = vor.u32 1.1754944e-38, %v2176
      %v2178 = vsel %vm2175, %v2177, %v2173
      %v2179 = vrcp.pop %v2099
      %v2180 = vmul.f32 %v2099, %v2179
      %v2181 = vsub.f32 1.0, %v2180
      %v2182 = vmul.f32 %v2179, %v2181
      %v2183 = vadd.f32 %v2179, %v2182
      %vm2184 = vweird.f32 %v2099
      %vm2185 = vweird.f32 %v2179
      %vm2186 = vmor %vm2184, %vm2185
      %v2187 = vsel %vm2186, %v2179, %v2183
      %v2188 = vand.u32 2147483647, %v2099
      %vm2189 = vcmp.eq.f32.partialorder %v2188, 8.507059e+37
      %v2190 = vand.u32 %v2099, 2147483648
      %v2191 = vor.u32 1.1754944e-38, %v2190
      %v2192 = vsel %vm2189, %v2191, %v2187
      %v2193 = vrcp.pop %v2102
      %v2194 = vmul.f32 %v2102, %v2193
      %v2195 = vsub.f32 1.0, %v2194
      %v2196 = vmul.f32 %v2193, %v2195
      %v2197 = vadd.f32 %v2193, %v2196
      %vm2198 = vweird.f32 %v2102
      %vm2199 = vweird.f32 %v2193
      %vm2200 = vmor %vm2198, %vm2199
      %v2201 = vsel %vm2200, %v2193, %v2197
      %v2202 = vand.u32 2147483647, %v2102
      %vm2203 = vcmp.eq.f32.partialorder %v2202, 8.507059e+37
      %v2204 = vand.u32 %v2102, 2147483648
      %v2205 = vor.u32 1.1754944e-38, %v2204
      %v2206 = vsel %vm2203, %v2205, %v2201
      %v2207 = vrcp.pop %v2105
      %v2208 = vmul.f32 %v2105, %v2207
      %v2209 = vsub.f32 1.0, %v2208
      %v2210 = vmul.f32 %v2207, %v2209
      %v2211 = vadd.f32 %v2207, %v2210
      %vm2212 = vweird.f32 %v2105
      %vm2213 = vweird.f32 %v2207
      %vm2214 = vmor %vm2212, %vm2213
      %v2215 = vsel %vm2214, %v2207, %v2211
      %v2216 = vand.u32 2147483647, %v2105
      %vm2217 = vcmp.eq.f32.partialorder %v2216, 8.507059e+37
      %v2218 = vand.u32 %v2105, 2147483648
      %v2219 = vor.u32 1.1754944e-38, %v2218
      %v2220 = vsel %vm2217, %v2219, %v2215
      %v2221 = vrcp.pop %v2108
      %v2222 = vmul.f32 %v2108, %v2221
      %v2223 = vsub.f32 1.0, %v2222
      %v2224 = vmul.f32 %v2221, %v2223
      %v2225 = vadd.f32 %v2221, %v2224
      %vm2226 = vweird.f32 %v2108
      %vm2227 = vweird.f32 %v2221
      %vm2228 = vmor %vm2226, %vm2227
      %v2229 = vsel %vm2228, %v2221, %v2225
      %v2230 = vand.u32 2147483647, %v2108
      %vm2231 = vcmp.eq.f32.partialorder %v2230, 8.507059e+37
      %v2232 = vand.u32 %v2108, 2147483648
      %v2233 = vor.u32 1.1754944e-38, %v2232
      %v2234 = vsel %vm2231, %v2233, %v2229
      %v2235 = vrcp.pop %v2111
      %v2236 = vmul.f32 %v2111, %v2235
      %v2237 = vsub.f32 1.0, %v2236
      %v2238 = vmul.f32 %v2235, %v2237
      %v2239 = vadd.f32 %v2235, %v2238
      %vm2240 = vweird.f32 %v2111
      %vm2241 = vweird.f32 %v2235
      %vm2242 = vmor %vm2240, %vm2241
      %v2243 = vsel %vm2242, %v2235, %v2239
      %v2244 = vand.u32 2147483647, %v2111
      %vm2245 = vcmp.eq.f32.partialorder %v2244, 8.507059e+37
      %v2246 = vand.u32 %v2111, 2147483648
      %v2247 = vor.u32 1.1754944e-38, %v2246
      %v2248 = vsel %vm2245, %v2247, %v2243
      %v2249 = vrcp.pop %v2114
      %v2250 = vmul.f32 %v2114, %v2249
      %v2251 = vsub.f32 1.0, %v2250
      %v2252 = vmul.f32 %v2249, %v2251
      %v2253 = vadd.f32 %v2249, %v2252
      %vm2254 = vweird.f32 %v2114
      %vm2255 = vweird.f32 %v2249
      %vm2256 = vmor %vm2254, %vm2255
      %v2257 = vsel %vm2256, %v2249, %v2253
      %v2258 = vand.u32 2147483647, %v2114
      %vm2259 = vcmp.eq.f32.partialorder %v2258, 8.507059e+37
      %v2260 = vand.u32 %v2114, 2147483648
      %v2261 = vor.u32 1.1754944e-38, %v2260
      %v2262 = vsel %vm2259, %v2261, %v2257
      %v2263 = vrcp.pop %v2117
      %v2264 = vmul.f32 %v2117, %v2263
      %v2265 = vsub.f32 1.0, %v2264
      %v2266 = vmul.f32 %v2263, %v2265
      %v2267 = vadd.f32 %v2263, %v2266
      %vm2268 = vweird.f32 %v2117
      %vm2269 = vweird.f32 %v2263
      %vm2270 = vmor %vm2268, %vm2269
      %v2271 = vsel %vm2270, %v2263, %v2267
      %v2272 = vand.u32 2147483647, %v2117
      %vm2273 = vcmp.eq.f32.partialorder %v2272, 8.507059e+37
      %v2274 = vand.u32 %v2117, 2147483648
      %v2275 = vor.u32 1.1754944e-38, %v2274
      %v2276 = vsel %vm2273, %v2275, %v2271
      %v2277 = vrcp.pop %v2120
      %v2278 = vmul.f32 %v2120, %v2277
      %v2279 = vsub.f32 1.0, %v2278
      %v2280 = vmul.f32 %v2277, %v2279
      %v2281 = vadd.f32 %v2277, %v2280
      %vm2282 = vweird.f32 %v2120
      %vm2283 = vweird.f32 %v2277
      %vm2284 = vmor %vm2282, %vm2283
      %v2285 = vsel %vm2284, %v2277, %v2281
      %v2286 = vand.u32 2147483647, %v2120
      %vm2287 = vcmp.eq.f32.partialorder %v2286, 8.507059e+37
      %v2288 = vand.u32 %v2120, 2147483648
      %v2289 = vor.u32 1.1754944e-38, %v2288
      %v2290 = vsel %vm2287, %v2289, %v2285
      %v2291 = vrcp.pop %v2123
      %v2292 = vmul.f32 %v2123, %v2291
      %v2293 = vsub.f32 1.0, %v2292
      %v2294 = vmul.f32 %v2291, %v2293
      %v2295 = vadd.f32 %v2291, %v2294
      %vm2296 = vweird.f32 %v2123
      %vm2297 = vweird.f32 %v2291
      %vm2298 = vmor %vm2296, %vm2297
      %v2299 = vsel %vm2298, %v2291, %v2295
      %v2300 = vand.u32 2147483647, %v2123
      %vm2301 = vcmp.eq.f32.partialorder %v2300, 8.507059e+37
      %v2302 = vand.u32 %v2123, 2147483648
      %v2303 = vor.u32 1.1754944e-38, %v2302
      %v2304 = vsel %vm2301, %v2303, %v2299
      %v2305 = vrcp.pop %v2126
      %v2306 = vmul.f32 %v2126, %v2305
      %v2307 = vsub.f32 1.0, %v2306
      %v2308 = vmul.f32 %v2305, %v2307
      %v2309 = vadd.f32 %v2305, %v2308
      %vm2310 = vweird.f32 %v2126
      %vm2311 = vweird.f32 %v2305
      %vm2312 = vmor %vm2310, %vm2311
      %v2313 = vsel %vm2312, %v2305, %v2309
      %v2314 = vand.u32 2147483647, %v2126
      %vm2315 = vcmp.eq.f32.partialorder %v2314, 8.507059e+37
      %v2316 = vand.u32 %v2126, 2147483648
      %v2317 = vor.u32 1.1754944e-38, %v2316
      %v2318 = vsel %vm2315, %v2317, %v2313
      %v2319 = vrcp.pop %v2129
      %v2320 = vmul.f32 %v2129, %v2319
      %v2321 = vsub.f32 1.0, %v2320
      %v2322 = vmul.f32 %v2319, %v2321
      %v2323 = vadd.f32 %v2319, %v2322
      %vm2324 = vweird.f32 %v2129
      %vm2325 = vweird.f32 %v2319
      %vm2326 = vmor %vm2324, %vm2325
      %v2327 = vsel %vm2326, %v2319, %v2323
      %v2328 = vand.u32 2147483647, %v2129
      %vm2329 = vcmp.eq.f32.partialorder %v2328, 8.507059e+37
      %v2330 = vand.u32 %v2129, 2147483648
      %v2331 = vor.u32 1.1754944e-38, %v2330
      %v2332 = vsel %vm2329, %v2331, %v2327
      %v2333 = vrcp.pop %v2132
      %v2334 = vmul.f32 %v2132, %v2333
      %v2335 = vsub.f32 1.0, %v2334
      %v2336 = vmul.f32 %v2333, %v2335
      %v2337 = vadd.f32 %v2333, %v2336
      %vm2338 = vweird.f32 %v2132
      %vm2339 = vweird.f32 %v2333
      %vm2340 = vmor %vm2338, %vm2339
      %v2341 = vsel %vm2340, %v2333, %v2337
      %v2342 = vand.u32 2147483647, %v2132
      %vm2343 = vcmp.eq.f32.partialorder %v2342, 8.507059e+37
      %v2344 = vand.u32 %v2132, 2147483648
      %v2345 = vor.u32 1.1754944e-38, %v2344
      %v2346 = vsel %vm2343, %v2345, %v2341
      %v2347 = vrcp.pop %v2135
      %v2348 = vmul.f32 %v2135, %v2347
      %v2349 = vsub.f32 1.0, %v2348
      %v2350 = vmul.f32 %v2347, %v2349
      %v2351 = vadd.f32 %v2347, %v2350
      %vm2352 = vweird.f32 %v2135
      %vm2353 = vweird.f32 %v2347
      %vm2354 = vmor %vm2352, %vm2353
      %v2355 = vsel %vm2354, %v2347, %v2351
      %v2356 = vand.u32 2147483647, %v2135
      %vm2357 = vcmp.eq.f32.partialorder %v2356, 8.507059e+37
      %v2358 = vand.u32 %v2135, 2147483648
      %v2359 = vor.u32 1.1754944e-38, %v2358
      %v2360 = vsel %vm2357, %v2359, %v2355
      %v2361 = vmul.f32 %v2025, %v2150
      %v2362 = vmul.f32 %v2027, %v2164
      %v2363 = vmul.f32 %v2029, %v2178
      %v2364 = vmul.f32 %v2031, %v2192
      %v2365 = vmul.f32 %v2033, %v2206
      %v2366 = vmul.f32 %v2035, %v2220
      %v2367 = vmul.f32 %v2037, %v2234
      %v2368 = vmul.f32 %v2039, %v2248
      %v2369 = vmul.f32 %v2041, %v2262
      %v2370 = vmul.f32 %v2043, %v2276
      %v2371 = vmul.f32 %v2045, %v2290
      %v2372 = vmul.f32 %v2047, %v2304
      %v2373 = vmul.f32 %v2049, %v2318
      %v2374 = vmul.f32 %v2051, %v2332
      %v2375 = vmul.f32 %v2053, %v2346
      %v2376 = vmul.f32 %v2055, %v2360
      %2377 = vst [vmem:[%s376 + $0x8] sm:$0xff] %v2361
      %2378 = vst [vmem:[%s376 + $0x18] sm:$0xff] %v2362
      %2379 = vst [vmem:[%s376 + $0x28] sm:$0xff] %v2363
      %2380 = vst [vmem:[%s376 + $0x38] sm:$0xff] %v2364
      %2381 = vst [vmem:[%s376 + $0x48] sm:$0xff] %v2365
      %2382 = vst [vmem:[%s376 + $0x58] sm:$0xff] %v2366
      %2383 = vst [vmem:[%s376 + $0x68] sm:$0xff] %v2367
      %2384 = vst [vmem:[%s376 + $0x78] sm:$0xff] %v2368
      %2385 = vst [vmem:[%s376 + $0x88] sm:$0xff] %v2369
      %2386 = vst [vmem:[%s376 + $0x98] sm:$0xff] %v2370
      %2387 = vst [vmem:[%s376 + $0xa8] sm:$0xff] %v2371
      %2388 = vst [vmem:[%s376 + $0xb8] sm:$0xff] %v2372
      %2389 = vst [vmem:[%s376 + $0xc8] sm:$0xff] %v2373
      %2390 = vst [vmem:[%s376 + $0xd8] sm:$0xff] %v2374
      %2391 = vst [vmem:[%s376 + $0xe8] sm:$0xff] %v2375
      %2392 = vst [vmem:[%s376 + $0xf8] sm:$0xff] %v2376
      %s2393 = smul.u32 16, %s20
      %p2394 = scmp.lt.s32.totalorder %s2393, 31
      %s2395 = scalar_select %p2394, %s2393, 31
      %s2396 = smul.addr %s2395, 2
      %s2397 = smul.addr %s2396, 8
      %s2398 = scalar_lea.vmem %s8, %s2397
      // Predicated region
      $region53: #{vae_forward.1} parent=51 // pred_check
        %p2399 = pneg %p226
      $region54: #{vae_forward.1} parent=51 // pred_check_branch
        %2401 = sbr.rel (%p2399) target = $region56
      $region55: #{vae_forward.1} parent=51 // pred_region
        %s2402 = smul.u32 16, %s20
      $region56: #{vae_forward.1} parent=51 // pred_fallthru
        _
    $region52: #{vae_forward.1} parent=5 // pred_fallthru
      _
    %p2403 = scmp.le.s32.totalorder 2, %s15
    // Predicated region
    $region57: #{vae_forward.1} parent=5 // pred_check
      %p2404 = pneg %p2403
    $region58: #{vae_forward.1} parent=5 // pred_check_branch
      %2406 = sbr.rel (%p2404) target = $region60
    $region59: #{vae_forward.1} parent=5 // pred_region
      %s2407 = ssub.s32 %s15, 2
      // Predicated region
      $region61: #{vae_forward.1} parent=59 // pred_check
        %p2408 = pneg %p232
      $region62: #{vae_forward.1} parent=59 // pred_check_branch
        %2410 = sbr.rel (%p2408) target = $region64
      $region63: #{vae_forward.1} parent=59 // pred_region
        %s2411 = smul.u32 16, %s21
        %p2412 = scmp.lt.s32.totalorder %s2411, 31
        %s2413 = scalar_select %p2412, %s2411, 31
        %s2414 = smul.addr %s2413, 2
        %s2415 = smul.addr %s2414, 8
        %s2416 = scalar_lea.vmem %s8, %s2415
      $region64: #{vae_forward.1} parent=59 // pred_fallthru
        _
    $region60: #{vae_forward.1} parent=5 // pred_fallthru
      _
  $region6: #{vae_forward.1} parent=0 // loop_footer
    %s19 = sadd.s32 1, %s15
  $region7: #{vae_forward.1} parent=0 // loop_footer_branch
    %14 = sbr.rel target = $region3
  $region8: #{vae_forward.1} parent=0 // loop_exit
    _

</llo_original>
